<compile_context>
chip_gen: v7x
topology: tpu7x:2x2x1
jax: 0.10.0
libtpu: 0.0.40
codegen_flags: <defaults>
</compile_context>

<pallas_src>
import functools

import jax
import jax.numpy as jnp
from jax.experimental import pallas as pl
from jax.experimental.pallas import tpu as pltpu


def _conv_bn_relu_kernel(x_ref, w_ref, shift_ref, o_ref, *,
                         k, stride, dilation, hout, wout, relu):
    """One padded image x one Cout tile: fused im2col + matmul + BN shift + ReLU.

    x_ref:     (1, Hp, Wp, Cin)   bf16  padded NHWC input image
    w_ref:     (K*K, Cin, TCO)    bf16  scale-folded conv weight, one slab/tap
    shift_ref: (1, TCO)           f32   folded BN shift
    o_ref:     (Hout*Wout, TCO)   f32   flattened output rows (lane-dense)
    """
    cin = x_ref.shape[-1]
    tco = o_ref.shape[-1]
    h_span = (hout - 1) * stride + 1
    w_span = (wout - 1) * stride + 1

    x_full = x_ref[0]                                   # (Hp, Wp, Cin)
    acc = jnp.zeros((hout * wout, tco), jnp.float32)    # f32 accumulator
    for kh in range(k):                                 # K*K static taps, unrolled
        for kw in range(k):
            h0 = kh * dilation
            w0 = kw * dilation
            xs = x_full[h0:h0 + h_span:stride, w0:w0 + w_span:stride, :]
            patch = xs.reshape(hout * wout, cin)        # (M_img, Cin)
            acc = acc + jnp.dot(patch, w_ref[kh * k + kw],
                                preferred_element_type=jnp.float32)
    y = acc + shift_ref[...]
    if relu:
        y = jnp.maximum(y, 0.0)
    o_ref[...] = y.astype(o_ref.dtype)


@functools.partial(
    jax.jit,
    static_argnames=("ksize", "stride", "padding", "dilation", "bn", "relu"))
def basic_conv_forward(x_nchw, weight, gamma, beta, run_mean, run_var,
                       bias=None, *, ksize, stride=1, padding=0, dilation=1,
                       eps=1e-5, bn=True, relu=True):
    """BasicConv forward: Conv2d (groups=1) + BatchNorm2d (eval) + ReLU.

    x_nchw : (N, Cin, H, W)      float32
    weight : (Cout, Cin, K, K)   float32   (PyTorch Conv2d layout)
    returns: (N, Cout, Hout, Wout) float32
    """
    n, cin, h, w = x_nchw.shape
    cout, cin_w, kh_, kw_ = weight.shape
    assert cin_w == cin and kh_ == ksize and kw_ == ksize, "groups != 1 unsupported"

    # Layout glue: NCHW -> NHWC + spatial pad (the only input-side copy; the
    # 9x im2col blow-up from v1 is gone).
    x_nhwc = jnp.transpose(x_nchw, (0, 2, 3, 1))
    xp = jnp.pad(x_nhwc, ((0, 0), (padding, padding), (padding, padding), (0, 0)))
    hp, wp = h + 2 * padding, w + 2 * padding
    hout = (hp - dilation * (ksize - 1) - 1) // stride + 1
    wout = (wp - dilation * (ksize - 1) - 1) // stride + 1

    # Fold BN (inference) into scale/shift; fold the scale into the weight.
    if bn:
        scale = gamma / jnp.sqrt(run_var + eps)                    # (Cout,)
        shift = beta - run_mean * scale
        if bias is not None:
            shift = shift + bias * scale
    else:
        scale = jnp.ones((cout,), jnp.float32)
        shift = bias if bias is not None else jnp.zeros((cout,), jnp.float32)

    # (Cout, Cin, K, K) -> (K*K, Cin, Cout), scale folded in.
    w_taps = jnp.transpose(weight, (2, 3, 1, 0)).reshape(ksize * ksize, cin, cout)
    w_taps = w_taps * scale[None, None, :]

    # Lane-dense output: pad Cout to a multiple of 128 (unmasked vector stores).
    tco = 128
    cout_pad = pl.cdiv(cout, tco) * tco
    w_taps = jnp.pad(w_taps, ((0, 0), (0, 0), (0, cout_pad - cout)))
    shift_p = jnp.pad(shift, (0, cout_pad - cout)).reshape(1, cout_pad)
    shift_p = shift_p.astype(jnp.float32)

    # bf16 operands for the MXU; accumulation stays f32 inside the kernel.
    xp_b = xp.astype(jnp.bfloat16)
    w_b = w_taps.astype(jnp.bfloat16)

    m_img = hout * wout
    n_co = cout_pad // tco

    kernel = functools.partial(_conv_bn_relu_kernel, k=ksize, stride=stride,
                               dilation=dilation, hout=hout, wout=wout,
                               relu=relu)

    out2d = pl.pallas_call(
        kernel,
        out_shape=jax.ShapeDtypeStruct((n * m_img, cout_pad), jnp.float32),
        grid=(n, n_co),
        in_specs=[
            pl.BlockSpec((1, hp, wp, cin), lambda b, co: (b, 0, 0, 0)),
            pl.BlockSpec((ksize * ksize, cin, tco), lambda b, co: (0, 0, co)),
            pl.BlockSpec((1, tco), lambda b, co: (0, co)),
        ],
        out_specs=pl.BlockSpec((m_img, tco), lambda b, co: (b, co)),
        compiler_params=pltpu.CompilerParams(
            dimension_semantics=("parallel", "parallel"),
            vmem_limit_bytes=32 * 1024 * 1024),
    )(xp_b, w_b, shift_p)

    out = out2d[:, :cout].reshape(n, hout, wout, cout)
    return jnp.transpose(out, (0, 3, 1, 2))  # back to NCHW


def _reference_bf16(x_nchw, weight, gamma, beta, run_mean, run_var,
                    *, stride, padding, dilation, eps=1e-5):
    """Module math (conv -> BN(eval) -> ReLU) evaluated with the same
    bf16-rounded operands the kernel uses (scale folded into the weight
    before rounding), accumulated in f32 — mirrors the kernel numerics."""
    scale = gamma / jnp.sqrt(run_var + eps)
    shift = beta - run_mean * scale
    w_folded = weight * scale[:, None, None, None]
    xb = x_nchw.astype(jnp.bfloat16).astype(jnp.float32)
    wb = w_folded.astype(jnp.bfloat16).astype(jnp.float32)
    y = jax.lax.conv_general_dilated(
        xb, wb, window_strides=(stride, stride),
        padding=[(padding, padding), (padding, padding)],
        rhs_dilation=(dilation, dilation),
        dimension_numbers=("NCHW", "OIHW", "NCHW"))
    y = y + shift[None, :, None, None]
    return jnp.maximum(y, 0.0)


def _reference_f32(x_nchw, weight, gamma, beta, run_mean, run_var,
                   *, stride, padding, dilation, eps=1e-5):
    """Pure f32 module math (exact PyTorch BasicConv semantics)."""
    y = jax.lax.conv_general_dilated(
        x_nchw, weight, window_strides=(stride, stride),
        padding=[(padding, padding), (padding, padding)],
        rhs_dilation=(dilation, dilation),
        dimension_numbers=("NCHW", "OIHW", "NCHW"))
    scale = gamma / jnp.sqrt(run_var + eps)
    shift = beta - run_mean * scale
    y = y * scale[None, :, None, None] + shift[None, :, None, None]
    return jnp.maximum(y, 0.0)


if __name__ == "__main__":
    # BasicConv(in_planes=4, out_planes=8, kernel_size=3, stride=1, padding=1,
    #           bn=True, relu=True, bias=False)
    N, CIN, H, W = 2, 4, 16, 16
    COUT, K, STRIDE, PAD, DIL = 8, 3, 1, 1, 1

    key = jax.random.PRNGKey(0)
    kx, kw_ = jax.random.split(key)
    x = jax.random.normal(kx, (N, CIN, H, W), dtype=jnp.float32)
    fan_in = CIN * K * K
    weight = jax.random.normal(kw_, (COUT, CIN, K, K), dtype=jnp.float32) * (2.0 / fan_in) ** 0.5
    # BatchNorm2d(affine=True) params + running stats (fresh-module defaults).
    gamma = jnp.ones((COUT,), jnp.float32)
    beta = jnp.zeros((COUT,), jnp.float32)
    run_mean = jnp.zeros((COUT,), jnp.float32)
    run_var = jnp.ones((COUT,), jnp.float32)

    out = basic_conv_forward(x, weight, gamma, beta, run_mean, run_var,
                             ksize=K, stride=STRIDE, padding=PAD, dilation=DIL)
    out = jax.block_until_ready(out)
    assert out.shape == (N, COUT, H, W), out.shape

    # Tight check against a reference with identical bf16-rounded operands.
    ref_b = _reference_bf16(x, weight, gamma, beta, run_mean, run_var,
                            stride=STRIDE, padding=PAD, dilation=DIL)
    assert jnp.allclose(out, ref_b, atol=1e-3, rtol=1e-3), \
        float(jnp.abs(out - ref_b).max())

    # Loose sanity check against pure f32 module semantics (bf16 input rounding).
    ref_f = _reference_f32(x, weight, gamma, beta, run_mean, run_var,
                           stride=STRIDE, padding=PAD, dilation=DIL)
    assert jnp.allclose(out, ref_f, atol=1e-1, rtol=1e-1), \
        float(jnp.abs(out - ref_f).max())

    print("KERNEL_OK")
</pallas_src>

<mosaic_0001>
module attributes {stable_mosaic.version = 11 : i64} {
  func.func @_conv_bn_relu_kernel(%arg0: i32, %arg1: i32, %arg2: memref<1x18x18x4xbf16, #tpu.memory_space<vmem>>, %arg3: memref<9x4x128xbf16, #tpu.memory_space<vmem>>, %arg4: memref<1x128xf32, #tpu.memory_space<vmem>>, %arg5: memref<256x128xf32, #tpu.memory_space<vmem>>) attributes {dimension_semantics = [#tpu.dimension_semantics<parallel>, #tpu.dimension_semantics<parallel>], iteration_bounds = array<i64: 2, 1>, scalar_prefetch = 0 : i64, scratch_operands = 0 : i64, tpu.core_type = #tpu.core_type<tc>, window_params = [{transform_indices = @transform_0, window_bounds = array<i64: 1, 18, 18, 4>}, {transform_indices = @transform_1, window_bounds = array<i64: 9, 4, 128>}, {transform_indices = @transform_2, window_bounds = array<i64: 1, 128>}, {transform_indices = @transform_3, window_bounds = array<i64: 256, 128>}]} {
    %c0 = arith.constant 0 : index
    %c0_0 = arith.constant 0 : index
    %c0_1 = arith.constant 0 : index
    %c0_2 = arith.constant 0 : index
    %0 = vector.load %arg2[%c0, %c0_0, %c0_1, %c0_2] : memref<1x18x18x4xbf16, #tpu.memory_space<vmem>>, vector<1x18x18x4xbf16>
    %1 = vector.shape_cast %0 : vector<1x18x18x4xbf16> to vector<18x18x4xbf16>
    %cst = arith.constant 0.000000e+00 : f32
    %2 = vector.broadcast %cst : f32 to vector<256x128xf32>
    %3 = vector.extract_strided_slice %1 {offsets = [0, 0, 0], sizes = [16, 16, 4], strides = [1, 1, 1]} : vector<18x18x4xbf16> to vector<16x16x4xbf16>
    %4 = vector.shape_cast %3 : vector<16x16x4xbf16> to vector<256x4xbf16>
    %c0_3 = arith.constant 0 : index
    %c0_4 = arith.constant 0 : index
    %c0_5 = arith.constant 0 : index
    %5 = vector.load %arg3[%c0_3, %c0_4, %c0_5] : memref<9x4x128xbf16, #tpu.memory_space<vmem>>, vector<1x4x128xbf16>
    %6 = vector.shape_cast %5 : vector<1x4x128xbf16> to vector<4x128xbf16>
    %cst_6 = arith.constant dense<0.000000e+00> : vector<256x128xf32>
    %7 = tpu.matmul %4, %6, %cst_6 {dimension_numbers = #tpu.dot_dimension_numbers<[1], [0], [0], [1], [0, 0, 1, 1], [], []>} : vector<256x4xbf16>, vector<4x128xbf16>, vector<256x128xf32> -> vector<256x128xf32>
    %8 = arith.addf %2, %7 : vector<256x128xf32>
    %9 = vector.extract_strided_slice %1 {offsets = [0, 1, 0], sizes = [16, 16, 4], strides = [1, 1, 1]} : vector<18x18x4xbf16> to vector<16x16x4xbf16>
    %10 = vector.shape_cast %9 : vector<16x16x4xbf16> to vector<256x4xbf16>
    %c1 = arith.constant 1 : index
    %c0_7 = arith.constant 0 : index
    %c0_8 = arith.constant 0 : index
    %11 = vector.load %arg3[%c1, %c0_7, %c0_8] : memref<9x4x128xbf16, #tpu.memory_space<vmem>>, vector<1x4x128xbf16>
    %12 = vector.shape_cast %11 : vector<1x4x128xbf16> to vector<4x128xbf16>
    %cst_9 = arith.constant dense<0.000000e+00> : vector<256x128xf32>
    %13 = tpu.matmul %10, %12, %cst_9 {dimension_numbers = #tpu.dot_dimension_numbers<[1], [0], [0], [1], [0, 0, 1, 1], [], []>} : vector<256x4xbf16>, vector<4x128xbf16>, vector<256x128xf32> -> vector<256x128xf32>
    %14 = arith.addf %8, %13 : vector<256x128xf32>
    %15 = vector.extract_strided_slice %1 {offsets = [0, 2, 0], sizes = [16, 16, 4], strides = [1, 1, 1]} : vector<18x18x4xbf16> to vector<16x16x4xbf16>
    %16 = vector.shape_cast %15 : vector<16x16x4xbf16> to vector<256x4xbf16>
    %c2 = arith.constant 2 : index
    %c0_10 = arith.constant 0 : index
    %c0_11 = arith.constant 0 : index
    %17 = vector.load %arg3[%c2, %c0_10, %c0_11] : memref<9x4x128xbf16, #tpu.memory_space<vmem>>, vector<1x4x128xbf16>
    %18 = vector.shape_cast %17 : vector<1x4x128xbf16> to vector<4x128xbf16>
    %cst_12 = arith.constant dense<0.000000e+00> : vector<256x128xf32>
    %19 = tpu.matmul %16, %18, %cst_12 {dimension_numbers = #tpu.dot_dimension_numbers<[1], [0], [0], [1], [0, 0, 1, 1], [], []>} : vector<256x4xbf16>, vector<4x128xbf16>, vector<256x128xf32> -> vector<256x128xf32>
    %20 = arith.addf %14, %19 : vector<256x128xf32>
    %21 = vector.extract_strided_slice %1 {offsets = [1, 0, 0], sizes = [16, 16, 4], strides = [1, 1, 1]} : vector<18x18x4xbf16> to vector<16x16x4xbf16>
    %22 = vector.shape_cast %21 : vector<16x16x4xbf16> to vector<256x4xbf16>
    %c3 = arith.constant 3 : index
    %c0_13 = arith.constant 0 : index
    %c0_14 = arith.constant 0 : index
    %23 = vector.load %arg3[%c3, %c0_13, %c0_14] : memref<9x4x128xbf16, #tpu.memory_space<vmem>>, vector<1x4x128xbf16>
    %24 = vector.shape_cast %23 : vector<1x4x128xbf16> to vector<4x128xbf16>
    %cst_15 = arith.constant dense<0.000000e+00> : vector<256x128xf32>
    %25 = tpu.matmul %22, %24, %cst_15 {dimension_numbers = #tpu.dot_dimension_numbers<[1], [0], [0], [1], [0, 0, 1, 1], [], []>} : vector<256x4xbf16>, vector<4x128xbf16>, vector<256x128xf32> -> vector<256x128xf32>
    %26 = arith.addf %20, %25 : vector<256x128xf32>
    %27 = vector.extract_strided_slice %1 {offsets = [1, 1, 0], sizes = [16, 16, 4], strides = [1, 1, 1]} : vector<18x18x4xbf16> to vector<16x16x4xbf16>
    %28 = vector.shape_cast %27 : vector<16x16x4xbf16> to vector<256x4xbf16>
    %c4 = arith.constant 4 : index
    %c0_16 = arith.constant 0 : index
    %c0_17 = arith.constant 0 : index
    %29 = vector.load %arg3[%c4, %c0_16, %c0_17] : memref<9x4x128xbf16, #tpu.memory_space<vmem>>, vector<1x4x128xbf16>
    %30 = vector.shape_cast %29 : vector<1x4x128xbf16> to vector<4x128xbf16>
    %cst_18 = arith.constant dense<0.000000e+00> : vector<256x128xf32>
    %31 = tpu.matmul %28, %30, %cst_18 {dimension_numbers = #tpu.dot_dimension_numbers<[1], [0], [0], [1], [0, 0, 1, 1], [], []>} : vector<256x4xbf16>, vector<4x128xbf16>, vector<256x128xf32> -> vector<256x128xf32>
    %32 = arith.addf %26, %31 : vector<256x128xf32>
    %33 = vector.extract_strided_slice %1 {offsets = [1, 2, 0], sizes = [16, 16, 4], strides = [1, 1, 1]} : vector<18x18x4xbf16> to vector<16x16x4xbf16>
    %34 = vector.shape_cast %33 : vector<16x16x4xbf16> to vector<256x4xbf16>
    %c5 = arith.constant 5 : index
    %c0_19 = arith.constant 0 : index
    %c0_20 = arith.constant 0 : index
    %35 = vector.load %arg3[%c5, %c0_19, %c0_20] : memref<9x4x128xbf16, #tpu.memory_space<vmem>>, vector<1x4x128xbf16>
    %36 = vector.shape_cast %35 : vector<1x4x128xbf16> to vector<4x128xbf16>
    %cst_21 = arith.constant dense<0.000000e+00> : vector<256x128xf32>
    %37 = tpu.matmul %34, %36, %cst_21 {dimension_numbers = #tpu.dot_dimension_numbers<[1], [0], [0], [1], [0, 0, 1, 1], [], []>} : vector<256x4xbf16>, vector<4x128xbf16>, vector<256x128xf32> -> vector<256x128xf32>
    %38 = arith.addf %32, %37 : vector<256x128xf32>
    %39 = vector.extract_strided_slice %1 {offsets = [2, 0, 0], sizes = [16, 16, 4], strides = [1, 1, 1]} : vector<18x18x4xbf16> to vector<16x16x4xbf16>
    %40 = vector.shape_cast %39 : vector<16x16x4xbf16> to vector<256x4xbf16>
    %c6 = arith.constant 6 : index
    %c0_22 = arith.constant 0 : index
    %c0_23 = arith.constant 0 : index
    %41 = vector.load %arg3[%c6, %c0_22, %c0_23] : memref<9x4x128xbf16, #tpu.memory_space<vmem>>, vector<1x4x128xbf16>
    %42 = vector.shape_cast %41 : vector<1x4x128xbf16> to vector<4x128xbf16>
    %cst_24 = arith.constant dense<0.000000e+00> : vector<256x128xf32>
    %43 = tpu.matmul %40, %42, %cst_24 {dimension_numbers = #tpu.dot_dimension_numbers<[1], [0], [0], [1], [0, 0, 1, 1], [], []>} : vector<256x4xbf16>, vector<4x128xbf16>, vector<256x128xf32> -> vector<256x128xf32>
    %44 = arith.addf %38, %43 : vector<256x128xf32>
    %45 = vector.extract_strided_slice %1 {offsets = [2, 1, 0], sizes = [16, 16, 4], strides = [1, 1, 1]} : vector<18x18x4xbf16> to vector<16x16x4xbf16>
    %46 = vector.shape_cast %45 : vector<16x16x4xbf16> to vector<256x4xbf16>
    %c7 = arith.constant 7 : index
    %c0_25 = arith.constant 0 : index
    %c0_26 = arith.constant 0 : index
    %47 = vector.load %arg3[%c7, %c0_25, %c0_26] : memref<9x4x128xbf16, #tpu.memory_space<vmem>>, vector<1x4x128xbf16>
    %48 = vector.shape_cast %47 : vector<1x4x128xbf16> to vector<4x128xbf16>
    %cst_27 = arith.constant dense<0.000000e+00> : vector<256x128xf32>
    %49 = tpu.matmul %46, %48, %cst_27 {dimension_numbers = #tpu.dot_dimension_numbers<[1], [0], [0], [1], [0, 0, 1, 1], [], []>} : vector<256x4xbf16>, vector<4x128xbf16>, vector<256x128xf32> -> vector<256x128xf32>
    %50 = arith.addf %44, %49 : vector<256x128xf32>
    %51 = vector.extract_strided_slice %1 {offsets = [2, 2, 0], sizes = [16, 16, 4], strides = [1, 1, 1]} : vector<18x18x4xbf16> to vector<16x16x4xbf16>
    %52 = vector.shape_cast %51 : vector<16x16x4xbf16> to vector<256x4xbf16>
    %c8 = arith.constant 8 : index
    %c0_28 = arith.constant 0 : index
    %c0_29 = arith.constant 0 : index
    %53 = vector.load %arg3[%c8, %c0_28, %c0_29] : memref<9x4x128xbf16, #tpu.memory_space<vmem>>, vector<1x4x128xbf16>
    %54 = vector.shape_cast %53 : vector<1x4x128xbf16> to vector<4x128xbf16>
    %cst_30 = arith.constant dense<0.000000e+00> : vector<256x128xf32>
    %55 = tpu.matmul %52, %54, %cst_30 {dimension_numbers = #tpu.dot_dimension_numbers<[1], [0], [0], [1], [0, 0, 1, 1], [], []>} : vector<256x4xbf16>, vector<4x128xbf16>, vector<256x128xf32> -> vector<256x128xf32>
    %56 = arith.addf %50, %55 : vector<256x128xf32>
    %c0_31 = arith.constant 0 : index
    %c0_32 = arith.constant 0 : index
    %57 = vector.load %arg4[%c0_31, %c0_32] : memref<1x128xf32, #tpu.memory_space<vmem>>, vector<1x128xf32>
    %58 = vector.broadcast %57 : vector<1x128xf32> to vector<256x128xf32>
    %59 = arith.addf %56, %58 : vector<256x128xf32>
    %cst_33 = arith.constant 0.000000e+00 : f32
    %60 = vector.broadcast %cst_33 : f32 to vector<256x128xf32>
    %61 = arith.maximumf %59, %60 : vector<256x128xf32>
    %c0_34 = arith.constant 0 : index
    %c0_35 = arith.constant 0 : index
    %62 = vector.load %arg5[%c0_34, %c0_35] : memref<256x128xf32, #tpu.memory_space<vmem>>, vector<256x128xf32>
    tpu.vector_store %arg5[%c0_34, %c0_35], %61 {strides = array<i32>} : memref<256x128xf32, #tpu.memory_space<vmem>>, vector<256x128xf32>,
    return
  }
  func.func @transform_0(%arg0: i32, %arg1: i32) -> (i32, i32, i32, i32) {
    %c0_i32 = arith.constant 0 : i32
    %c0_i32_0 = arith.constant 0 : i32
    %c0_i32_1 = arith.constant 0 : i32
    %c0_i32_2 = arith.constant 0 : i32
    return %arg0, %c0_i32, %c0_i32_0, %c0_i32_1 : i32, i32, i32, i32
  }
  func.func @transform_1(%arg0: i32, %arg1: i32) -> (i32, i32, i32) {
    %c0_i32 = arith.constant 0 : i32
    %c0_i32_0 = arith.constant 0 : i32
    %c0_i32_1 = arith.constant 0 : i32
    return %c0_i32, %c0_i32_0, %arg1 : i32, i32, i32
  }
  func.func @transform_2(%arg0: i32, %arg1: i32) -> (i32, i32) {
    %c0_i32 = arith.constant 0 : i32
    %c0_i32_0 = arith.constant 0 : i32
    return %c0_i32, %arg1 : i32, i32
  }
  func.func @transform_3(%arg0: i32, %arg1: i32) -> (i32, i32) {
    %c0_i32 = arith.constant 0 : i32
    return %arg0, %arg1 : i32, i32
  }
}

</mosaic_0001>

<llo_original>
// kernel: basic_conv_forward.1
$region0: #{basic_conv_forward.1}
  #allocation0 [shape = 'u32[]', space=smem, size = 0x4, offset = 0x4, fixed_abs, tag = 'smem constant byte address 0x4 - core index']
  #allocation1 [shape = 'u32[144,128]{1,0:T(1,128)}', space=vmem, size = 0x12000, scoped, tag = 'internal scratch']
  %s0 = inlined_call_operand.vmem [shape: bf16[2,18,18,4], index: 0, kind: input, shape index: {}]
  %s1 = inlined_call_operand.vmem [shape: bf16[9,4,128], index: 1, kind: input, shape index: {}]
  %s2 = inlined_call_operand.vmem [shape: f32[1,128], index: 2, kind: input, shape index: {}]
  %s3 = inlined_call_operand.vmem [shape: f32[512,128], index: 3, kind: output, shape index: {}]
  %s4 = sld [smem:[#allocation0]]
  $region45: #{basic_conv_forward.1} parent=0
    _
  %s6 = ssub.s32 1, %s4
  %s7 = scalar_select 0, %s6, %s4
  loop: start=0, step=1, limit=4
  $region2: #{basic_conv_forward.1} parent=0 // loop_pre_header
    _
  $region3: #{basic_conv_forward.1} parent=0 // loop_header
    %s9 = sphi 0, %s13
    %p10 = scmp.ge.s32.totalorder %s9, 4
    %s16 = sphi 0, %s28
    %s17 = sphi 0, %s24
    %s18 = sphi 0, %s16
    %s19 = sphi 0, %s17
    %s20 = sphi 0, %s18
    %s21 = sphi 0, %s19
    %s31 = sphi 0, %s33
    %s34 = sphi 0, %s31
    %s35 = sphi 0, %s34
    %s51 = sphi 0, %s35
    %s57 = sphi 0, %s59
    %s60 = sphi 0, %s57
    %s61 = sphi 0, %s60
    %s77 = sphi 0, %s61
    %s83 = sphi 0, %s85
    %s86 = sphi 0, %s83
    %s87 = sphi 0, %s86
    %s103 = sphi 0, %s87
    %s111 = sphi 0, %s113
    %s114 = sphi 0, %s111
    %s115 = sphi 0, %s114
    %s131 = sphi 0, %s115
  $region4: #{basic_conv_forward.1} parent=0 // loop_header_branch
    %12 = sbr.rel (%p10) target = $region8
  $region5: #{basic_conv_forward.1} parent=0 // loop_body
    %s14 = ssub.s32 %s9, 1
    %s15 = ssub.s32 %s9, 2
    %s22 = sadd.s32 1, %s17
    %p23 = scmp.ge.s32.totalorder %s22, 1
    %s24 = scalar_select %p23, 0, %s22
    %s25 = sadd.s32 1, %s16
    %s26 = scalar_select %p23, %s25, %s16
    %p27 = scmp.ge.s32.totalorder %s26, 2
    %s28 = scalar_select %p27, 0, %s26
    %s29 = ssub.s32 %s16, %s28
    %p30 = scmp.eq.s32.totalorder %s29, 0
    %s32 = sadd.s32 %s31, 1
    %s33 = scalar_select %p30, %s31, %s32
    %p36 = pneg %p30
    %p37 = scmp.eq.s32.totalorder %s9, 1
    %p38 = por %p36, %p37
    %p39 = scmp.ne.s32.totalorder %s31, %s34
    %p40 = scmp.eq.s32.totalorder %s9, 0
    %p41 = por %p39, %p40
    %p42 = scmp.ne.s32.totalorder %s31, %s34
    %p43 = scmp.eq.s32.totalorder %s14, 1
    %p44 = por %p42, %p43
    %p45 = scmp.ne.s32.totalorder %s34, %s35
    %p46 = scmp.eq.s32.totalorder %s14, 0
    %p47 = por %p45, %p46
    %p48 = scmp.ne.s32.totalorder %s34, %s35
    %p49 = scmp.eq.s32.totalorder %s15, 1
    %p50 = por %p48, %p49
    %p52 = scmp.ne.s32.totalorder %s35, %s51
    %p53 = scmp.eq.s32.totalorder %s15, 0
    %p54 = por %p52, %p53
    %s55 = ssub.s32 %s17, %s24
    %p56 = scmp.eq.s32.totalorder %s55, 0
    %s58 = sadd.s32 %s57, 1
    %s59 = scalar_select %p56, %s57, %s58
    %p62 = pneg %p56
    %p63 = scmp.eq.s32.totalorder %s9, 1
    %p64 = por %p62, %p63
    %p65 = scmp.ne.s32.totalorder %s57, %s60
    %p66 = scmp.eq.s32.totalorder %s9, 0
    %p67 = por %p65, %p66
    %p68 = scmp.ne.s32.totalorder %s57, %s60
    %p69 = scmp.eq.s32.totalorder %s14, 1
    %p70 = por %p68, %p69
    %p71 = scmp.ne.s32.totalorder %s60, %s61
    %p72 = scmp.eq.s32.totalorder %s14, 0
    %p73 = por %p71, %p72
    %p74 = scmp.ne.s32.totalorder %s60, %s61
    %p75 = scmp.eq.s32.totalorder %s15, 1
    %p76 = por %p74, %p75
    %p78 = scmp.ne.s32.totalorder %s61, %s77
    %p79 = scmp.eq.s32.totalorder %s15, 0
    %p80 = por %p78, %p79
    %s81 = ssub.s32 %s17, %s24
    %p82 = scmp.eq.s32.totalorder %s81, 0
    %s84 = sadd.s32 %s83, 1
    %s85 = scalar_select %p82, %s83, %s84
    %p88 = pneg %p82
    %p89 = scmp.eq.s32.totalorder %s9, 1
    %p90 = por %p88, %p89
    %p91 = scmp.ne.s32.totalorder %s83, %s86
    %p92 = scmp.eq.s32.totalorder %s9, 0
    %p93 = por %p91, %p92
    %p94 = scmp.ne.s32.totalorder %s83, %s86
    %p95 = scmp.eq.s32.totalorder %s14, 1
    %p96 = por %p94, %p95
    %p97 = scmp.ne.s32.totalorder %s86, %s87
    %p98 = scmp.eq.s32.totalorder %s14, 0
    %p99 = por %p97, %p98
    %p100 = scmp.ne.s32.totalorder %s86, %s87
    %p101 = scmp.eq.s32.totalorder %s15, 1
    %p102 = por %p100, %p101
    %p104 = scmp.ne.s32.totalorder %s87, %s103
    %p105 = scmp.eq.s32.totalorder %s15, 0
    %p106 = por %p104, %p105
    %s107 = ssub.s32 %s16, %s28
    %s108 = ssub.s32 %s17, %s24
    %s109 = sor.u32 %s107, %s108
    %p110 = scmp.eq.s32.totalorder %s109, 0
    %s112 = sadd.s32 %s111, 1
    %s113 = scalar_select %p110, %s111, %s112
    %p116 = pneg %p110
    %p117 = scmp.eq.s32.totalorder %s9, 1
    %p118 = por %p116, %p117
    %p119 = scmp.ne.s32.totalorder %s111, %s114
    %p120 = scmp.eq.s32.totalorder %s9, 0
    %p121 = por %p119, %p120
    %p122 = scmp.ne.s32.totalorder %s111, %s114
    %p123 = scmp.eq.s32.totalorder %s14, 1
    %p124 = por %p122, %p123
    %p125 = scmp.ne.s32.totalorder %s114, %s115
    %p126 = scmp.eq.s32.totalorder %s14, 0
    %p127 = por %p125, %p126
    %p128 = scmp.ne.s32.totalorder %s114, %s115
    %p129 = scmp.eq.s32.totalorder %s15, 1
    %p130 = por %p128, %p129
    %p132 = scmp.ne.s32.totalorder %s115, %s131
    %p133 = scmp.eq.s32.totalorder %s15, 0
    %p134 = por %p132, %p133
    %p135 = scmp.le.s32.totalorder 1, %s9
    %p136 = scmp.lt.s32.totalorder %s9, 3
    %p137 = pnand %p135, %p136
    %p138 = pneg %p137
    // Predicated region
    $region9: #{basic_conv_forward.1} parent=5 // pred_check
      _
    $region10: #{basic_conv_forward.1} parent=5 // pred_check_branch
      %140 = sbr.rel (%p137) target = $region12
    $region11: #{basic_conv_forward.1} parent=5 // pred_region
      %s141 = ssub.s32 %s9, 1
      // Predicated region
      $region13: #{basic_conv_forward.1} parent=11 // pred_check
        %p142 = pneg %p73
      $region14: #{basic_conv_forward.1} parent=11 // pred_check_branch
        %144 = sbr.rel (%p142) target = $region16
      $region15: #{basic_conv_forward.1} parent=11 // pred_region
        %p145 = scmp.lt.s32.totalorder %s19, 0
        %s146 = scalar_select %p145, %s19, 0
        %s147 = smul.addr %s146, 2
        %s148 = scalar_lea.vmem %s1, %s147
      $region16: #{basic_conv_forward.1} parent=11 // pred_fallthru
        _
      // Predicated region
      $region17: #{basic_conv_forward.1} parent=11 // pred_check
        %p149 = pneg %p99
      $region18: #{basic_conv_forward.1} parent=11 // pred_check_branch
        %151 = sbr.rel (%p149) target = $region20
      $region19: #{basic_conv_forward.1} parent=11 // pred_region
        %p152 = scmp.lt.s32.totalorder %s19, 0
        %s153 = scalar_select %p152, %s19, 0
        %s154 = scalar_lea.vmem %s2, %s153
      $region20: #{basic_conv_forward.1} parent=11 // pred_fallthru
        _
    $region12: #{basic_conv_forward.1} parent=5 // pred_fallthru
      _
    %p155 = scmp.lt.s32.totalorder %s9, 2
    // Predicated region
    $region21: #{basic_conv_forward.1} parent=5 // pred_check
      %p156 = pneg %p155
    $region22: #{basic_conv_forward.1} parent=5 // pred_check_branch
      %158 = sbr.rel (%p156) target = $region24
    $region23: #{basic_conv_forward.1} parent=5 // pred_region
      // Predicated region
      $region25: #{basic_conv_forward.1} parent=23 // pred_check
        %p159 = pneg %p41
      $region26: #{basic_conv_forward.1} parent=23 // pred_check_branch
        %161 = sbr.rel (%p159) target = $region28
      $region27: #{basic_conv_forward.1} parent=23 // pred_region
        %p162 = scmp.lt.s32.totalorder %s16, 1
        %s163 = scalar_select %p162, %s16, 1
        %s164 = smul.addr %s163, 54
        %s165 = smul.addr %s164, 4
        %s166 = scalar_lea.vmem %s0, %s165
      $region28: #{basic_conv_forward.1} parent=23 // pred_fallthru
        _
    $region24: #{basic_conv_forward.1} parent=5 // pred_fallthru
      _
    %p167 = scmp.le.s32.totalorder 1, %s9
    %p168 = scmp.lt.s32.totalorder %s9, 3
    %p169 = pnand %p167, %p168
    %p170 = pneg %p169
    // Predicated region
    $region29: #{basic_conv_forward.1} parent=5 // pred_check
      _
    $region30: #{basic_conv_forward.1} parent=5 // pred_check_branch
      %172 = sbr.rel (%p169) target = $region32
    $region31: #{basic_conv_forward.1} parent=5 // pred_region
      %s173 = ssub.s32 %s9, 1
      %p174 = scmp.lt.s32.totalorder %s18, 1
      %s175 = scalar_select %p174, %s18, 1
      %s176 = smul.addr %s175, 54
      %s177 = smul.addr %s176, 4
      %s178 = scalar_lea.vmem %s0, %s177
      %p179 = pneg %p47
      %p180 = pneg %p44
      %p181 = scmp.lt.s32.totalorder %s19, 0
      %s182 = scalar_select %p181, %s19, 0
      %s183 = smul.addr %s182, 2
      %s184 = scalar_lea.vmem %s1, %s183
      %p185 = pneg %p73
      %p186 = pneg %p70
      %p187 = scmp.lt.s32.totalorder %s19, 0
      %s188 = scalar_select %p187, %s19, 0
      %s189 = scalar_lea.vmem %s2, %s188
      %p190 = pneg %p99
      %p191 = pneg %p96
      %p192 = pneg %p127
      %p193 = pneg %p124
      %s194 = smul.u32 32, %s18
      %p195 = scmp.lt.s32.totalorder %s194, 63
      %s196 = scalar_select %p195, %s194, 63
      %p197 = scmp.lt.s32.totalorder %s19, 0
      %s198 = scalar_select %p197, %s19, 0
      %s199 = sadd.s32 %s198, %s196
      %s200 = smul.addr %s199, 8
      %s201 = scalar_lea.vmem %s3, %s200
      %p202 = scmp.lt.s32.totalorder %s18, 1
      %s203 = scalar_select %p202, %s18, 1
      %s204 = smul.addr %s203, 54
      %s205 = smul.addr %s204, 4
      %s206 = scalar_lea.vmem %s0, %s205
      %p207 = scmp.lt.s32.totalorder %s19, 0
      %s208 = scalar_select %p207, %s19, 0
      %s209 = smul.addr %s208, 2
      %s210 = scalar_lea.vmem %s1, %s209
      %p211 = scmp.lt.s32.totalorder %s19, 0
      %s212 = scalar_select %p211, %s19, 0
      %s213 = scalar_lea.vmem %s2, %s212
      %s214 = smul.u32 32, %s18
      %p215 = scmp.lt.s32.totalorder %s214, 63
      %s216 = scalar_select %p215, %s214, 63
      %p217 = scmp.lt.s32.totalorder %s19, 0
      %s218 = scalar_select %p217, %s19, 0
      %s219 = sadd.s32 %s218, %s216
      %s220 = smul.addr %s219, 8
      %s221 = scalar_lea.vmem %s3, %s220
      %s222 = smul.u32 32, %s18
      %v224 = vld [vmem:[%s206] sm:$0xf]
      %v225 = vld [vmem:[%s206 + $0x4] sm:$0xf]
      %v226 = vld [vmem:[%s206 + $0x8] sm:$0x1]
      %v227 = vld [vmem:[%s206 + $0xc] sm:$0xf]
      %v228 = vld [vmem:[%s206 + $0x10] sm:$0xf]
      %v229 = vld [vmem:[%s206 + $0x14] sm:$0x1]
      %v230 = vld [vmem:[%s206 + $0x18] sm:$0xf]
      %v231 = vld [vmem:[%s206 + $0x1c] sm:$0xf]
      %v232 = vld [vmem:[%s206 + $0x20] sm:$0x1]
      %v233 = vld [vmem:[%s206 + $0x24] sm:$0xf]
      %v234 = vld [vmem:[%s206 + $0x28] sm:$0xf]
      %v235 = vld [vmem:[%s206 + $0x2c] sm:$0x1]
      %v236 = vld [vmem:[%s206 + $0x30] sm:$0xf]
      %v237 = vld [vmem:[%s206 + $0x34] sm:$0xf]
      %v238 = vld [vmem:[%s206 + $0x38] sm:$0x1]
      %v239 = vld [vmem:[%s206 + $0x3c] sm:$0xf]
      %v240 = vld [vmem:[%s206 + $0x40] sm:$0xf]
      %v241 = vld [vmem:[%s206 + $0x44] sm:$0x1]
      %v242 = vld [vmem:[%s206 + $0x48] sm:$0xf]
      %v243 = vld [vmem:[%s206 + $0x4c] sm:$0xf]
      %v244 = vld [vmem:[%s206 + $0x50] sm:$0x1]
      %v245 = vld [vmem:[%s206 + $0x54] sm:$0xf]
      %v246 = vld [vmem:[%s206 + $0x58] sm:$0xf]
      %v247 = vld [vmem:[%s206 + $0x5c] sm:$0x1]
      %v248 = vld [vmem:[%s206 + $0x60] sm:$0xf]
      %v249 = vld [vmem:[%s206 + $0x64] sm:$0xf]
      %v250 = vld [vmem:[%s206 + $0x68] sm:$0x1]
      %v251 = vld [vmem:[%s206 + $0x6c] sm:$0xf]
      %v252 = vld [vmem:[%s206 + $0x70] sm:$0xf]
      %v253 = vld [vmem:[%s206 + $0x74] sm:$0x1]
      %v254 = vld [vmem:[%s206 + $0x78] sm:$0xf]
      %v255 = vld [vmem:[%s206 + $0x7c] sm:$0xf]
      %v256 = vld [vmem:[%s206 + $0x80] sm:$0x1]
      %v257 = vld [vmem:[%s206 + $0x84] sm:$0xf]
      %v258 = vld [vmem:[%s206 + $0x88] sm:$0xf]
      %v259 = vld [vmem:[%s206 + $0x8c] sm:$0x1]
      %v260 = vld [vmem:[%s206 + $0x90] sm:$0xf]
      %v261 = vld [vmem:[%s206 + $0x94] sm:$0xf]
      %v262 = vld [vmem:[%s206 + $0x98] sm:$0x1]
      %v263 = vld [vmem:[%s206 + $0x9c] sm:$0xf]
      %v264 = vld [vmem:[%s206 + $0xa0] sm:$0xf]
      %v265 = vld [vmem:[%s206 + $0xa4] sm:$0x1]
      %v266 = vld [vmem:[%s206 + $0xa8] sm:$0xf]
      %v267 = vld [vmem:[%s206 + $0xac] sm:$0xf]
      %v268 = vld [vmem:[%s206 + $0xb0] sm:$0x1]
      %v269 = vld [vmem:[%s206 + $0xb4] sm:$0xf]
      %v270 = vld [vmem:[%s206 + $0xb8] sm:$0xf]
      %v271 = vld [vmem:[%s206 + $0xbc] sm:$0x1]
      %v272 = vld [vmem:[%s206 + $0xc0] sm:$0xf]
      %v273 = vld [vmem:[%s206 + $0xc4] sm:$0xf]
      %v274 = vld [vmem:[%s206 + $0xc8] sm:$0x1]
      %v275 = vld [vmem:[%s206 + $0xcc] sm:$0xf]
      %v276 = vld [vmem:[%s206 + $0xd0] sm:$0xf]
      %v277 = vld [vmem:[%s206 + $0xd4] sm:$0x1]
      %v278 = vld [vmem:[%s210] sm:$0x3]
      %vm279 = vsmask.f32 3328
      %vm280 = vsmask.f32 7440
      %vm281 = vmor %vm279, %vm280
      %v283 = vshrl.u32 %v224, 16
      %v285 = vrot.slane %v283, 4
      %v286 = vshll.u32 %v224, 16
      %v288 = vrot.slane %v286, 5
      %v289 = vor.u32 %v285, %v288
      %v290 = vrot.slane %v289, 4
      %v292 = vshll.u32 %v225, 16
      %v294 = vrot.slane %v292, 5
      %v295 = vsel %vm281, %v290, %v294
      %v296 = vshrl.u32 %v225, 16
      %v298 = vrot.slane %v296, 4
      %v299 = vor.u32 %v298, %v294
      %v300 = vrot.slane %v299, 4
      %v302 = vshll.u32 %v226, 16
      %v304 = vrot.slane %v302, 5
      %v305 = vsel %vm281, %v300, %v304
      %v307 = vshrl.u32 %v227, 16
      %v309 = vrot.slane %v307, 4
      %v310 = vshll.u32 %v227, 16
      %v312 = vrot.slane %v310, 5
      %v313 = vor.u32 %v309, %v312
      %v314 = vrot.slane %v313, 4
      %v316 = vshll.u32 %v228, 16
      %v318 = vrot.slane %v316, 5
      %v319 = vsel %vm281, %v314, %v318
      %v320 = vshrl.u32 %v228, 16
      %v322 = vrot.slane %v320, 4
      %v323 = vor.u32 %v322, %v318
      %v324 = vrot.slane %v323, 4
      %v326 = vshll.u32 %v229, 16
      %v328 = vrot.slane %v326, 5
      %v329 = vsel %vm281, %v324, %v328
      %v331 = vshrl.u32 %v230, 16
      %v333 = vrot.slane %v331, 4
      %v334 = vshll.u32 %v230, 16
      %v336 = vrot.slane %v334, 5
      %v337 = vor.u32 %v333, %v336
      %v338 = vrot.slane %v337, 4
      %v340 = vshll.u32 %v231, 16
      %v342 = vrot.slane %v340, 5
      %v343 = vsel %vm281, %v338, %v342
      %v344 = vshrl.u32 %v231, 16
      %v346 = vrot.slane %v344, 4
      %v347 = vor.u32 %v346, %v342
      %v348 = vrot.slane %v347, 4
      %v350 = vshll.u32 %v232, 16
      %v352 = vrot.slane %v350, 5
      %v353 = vsel %vm281, %v348, %v352
      %v355 = vshrl.u32 %v233, 16
      %v357 = vrot.slane %v355, 4
      %v358 = vshll.u32 %v233, 16
      %v360 = vrot.slane %v358, 5
      %v361 = vor.u32 %v357, %v360
      %v362 = vrot.slane %v361, 4
      %v364 = vshll.u32 %v234, 16
      %v366 = vrot.slane %v364, 5
      %v367 = vsel %vm281, %v362, %v366
      %v368 = vshrl.u32 %v234, 16
      %v370 = vrot.slane %v368, 4
      %v371 = vor.u32 %v370, %v366
      %v372 = vrot.slane %v371, 4
      %v374 = vshll.u32 %v235, 16
      %v376 = vrot.slane %v374, 5
      %v377 = vsel %vm281, %v372, %v376
      %v379 = vshrl.u32 %v236, 16
      %v381 = vrot.slane %v379, 4
      %v382 = vshll.u32 %v236, 16
      %v384 = vrot.slane %v382, 5
      %v385 = vor.u32 %v381, %v384
      %v386 = vrot.slane %v385, 4
      %v388 = vshll.u32 %v237, 16
      %v390 = vrot.slane %v388, 5
      %v391 = vsel %vm281, %v386, %v390
      %v392 = vshrl.u32 %v237, 16
      %v394 = vrot.slane %v392, 4
      %v395 = vor.u32 %v394, %v390
      %v396 = vrot.slane %v395, 4
      %v398 = vshll.u32 %v238, 16
      %v400 = vrot.slane %v398, 5
      %v401 = vsel %vm281, %v396, %v400
      %v403 = vshrl.u32 %v239, 16
      %v405 = vrot.slane %v403, 4
      %v406 = vshll.u32 %v239, 16
      %v408 = vrot.slane %v406, 5
      %v409 = vor.u32 %v405, %v408
      %v410 = vrot.slane %v409, 4
      %v412 = vshll.u32 %v240, 16
      %v414 = vrot.slane %v412, 5
      %v415 = vsel %vm281, %v410, %v414
      %v416 = vshrl.u32 %v240, 16
      %v418 = vrot.slane %v416, 4
      %v419 = vor.u32 %v418, %v414
      %v420 = vrot.slane %v419, 4
      %v422 = vshll.u32 %v241, 16
      %v424 = vrot.slane %v422, 5
      %v425 = vsel %vm281, %v420, %v424
      %v427 = vshrl.u32 %v242, 16
      %v429 = vrot.slane %v427, 4
      %v430 = vshll.u32 %v242, 16
      %v432 = vrot.slane %v430, 5
      %v433 = vor.u32 %v429, %v432
      %v434 = vrot.slane %v433, 4
      %v436 = vshll.u32 %v243, 16
      %v438 = vrot.slane %v436, 5
      %v439 = vsel %vm281, %v434, %v438
      %v440 = vshrl.u32 %v243, 16
      %v442 = vrot.slane %v440, 4
      %v443 = vor.u32 %v442, %v438
      %v444 = vrot.slane %v443, 4
      %v446 = vshll.u32 %v244, 16
      %v448 = vrot.slane %v446, 5
      %v449 = vsel %vm281, %v444, %v448
      %v451 = vshrl.u32 %v245, 16
      %v453 = vrot.slane %v451, 4
      %v454 = vshll.u32 %v245, 16
      %v456 = vrot.slane %v454, 5
      %v457 = vor.u32 %v453, %v456
      %v458 = vrot.slane %v457, 4
      %v460 = vshll.u32 %v246, 16
      %v462 = vrot.slane %v460, 5
      %v463 = vsel %vm281, %v458, %v462
      %v464 = vshrl.u32 %v246, 16
      %v466 = vrot.slane %v464, 4
      %v467 = vor.u32 %v466, %v462
      %v468 = vrot.slane %v467, 4
      %v470 = vshll.u32 %v247, 16
      %v472 = vrot.slane %v470, 5
      %v473 = vsel %vm281, %v468, %v472
      %v475 = vshrl.u32 %v248, 16
      %v477 = vrot.slane %v475, 4
      %v478 = vshll.u32 %v248, 16
      %v480 = vrot.slane %v478, 5
      %v481 = vor.u32 %v477, %v480
      %v482 = vrot.slane %v481, 4
      %v484 = vshll.u32 %v249, 16
      %v486 = vrot.slane %v484, 5
      %v487 = vsel %vm281, %v482, %v486
      %v488 = vshrl.u32 %v249, 16
      %v490 = vrot.slane %v488, 4
      %v491 = vor.u32 %v490, %v486
      %v492 = vrot.slane %v491, 4
      %v494 = vshll.u32 %v250, 16
      %v496 = vrot.slane %v494, 5
      %v497 = vsel %vm281, %v492, %v496
      %v499 = vshrl.u32 %v251, 16
      %v501 = vrot.slane %v499, 4
      %v502 = vshll.u32 %v251, 16
      %v504 = vrot.slane %v502, 5
      %v505 = vor.u32 %v501, %v504
      %v506 = vrot.slane %v505, 4
      %v508 = vshll.u32 %v252, 16
      %v510 = vrot.slane %v508, 5
      %v511 = vsel %vm281, %v506, %v510
      %v512 = vshrl.u32 %v252, 16
      %v514 = vrot.slane %v512, 4
      %v515 = vor.u32 %v514, %v510
      %v516 = vrot.slane %v515, 4
      %v518 = vshll.u32 %v253, 16
      %v520 = vrot.slane %v518, 5
      %v521 = vsel %vm281, %v516, %v520
      %v523 = vshrl.u32 %v254, 16
      %v525 = vrot.slane %v523, 4
      %v526 = vshll.u32 %v254, 16
      %v528 = vrot.slane %v526, 5
      %v529 = vor.u32 %v525, %v528
      %v530 = vrot.slane %v529, 4
      %v532 = vshll.u32 %v255, 16
      %v534 = vrot.slane %v532, 5
      %v535 = vsel %vm281, %v530, %v534
      %v536 = vshrl.u32 %v255, 16
      %v538 = vrot.slane %v536, 4
      %v539 = vor.u32 %v538, %v534
      %v540 = vrot.slane %v539, 4
      %v542 = vshll.u32 %v256, 16
      %v544 = vrot.slane %v542, 5
      %v545 = vsel %vm281, %v540, %v544
      %v547 = vshrl.u32 %v257, 16
      %v549 = vrot.slane %v547, 4
      %v550 = vshll.u32 %v257, 16
      %v552 = vrot.slane %v550, 5
      %v553 = vor.u32 %v549, %v552
      %v554 = vrot.slane %v553, 4
      %v556 = vshll.u32 %v258, 16
      %v558 = vrot.slane %v556, 5
      %v559 = vsel %vm281, %v554, %v558
      %v560 = vshrl.u32 %v258, 16
      %v562 = vrot.slane %v560, 4
      %v563 = vor.u32 %v562, %v558
      %v564 = vrot.slane %v563, 4
      %v566 = vshll.u32 %v259, 16
      %v568 = vrot.slane %v566, 5
      %v569 = vsel %vm281, %v564, %v568
      %v571 = vshrl.u32 %v260, 16
      %v573 = vrot.slane %v571, 4
      %v574 = vshll.u32 %v260, 16
      %v576 = vrot.slane %v574, 5
      %v577 = vor.u32 %v573, %v576
      %v578 = vrot.slane %v577, 4
      %v580 = vshll.u32 %v261, 16
      %v582 = vrot.slane %v580, 5
      %v583 = vsel %vm281, %v578, %v582
      %v584 = vshrl.u32 %v261, 16
      %v586 = vrot.slane %v584, 4
      %v587 = vor.u32 %v586, %v582
      %v588 = vrot.slane %v587, 4
      %v590 = vshll.u32 %v262, 16
      %v592 = vrot.slane %v590, 5
      %v593 = vsel %vm281, %v588, %v592
      %v595 = vshrl.u32 %v263, 16
      %v597 = vrot.slane %v595, 4
      %v598 = vshll.u32 %v263, 16
      %v600 = vrot.slane %v598, 5
      %v601 = vor.u32 %v597, %v600
      %v602 = vrot.slane %v601, 4
      %v604 = vshll.u32 %v264, 16
      %v606 = vrot.slane %v604, 5
      %v607 = vsel %vm281, %v602, %v606
      %v608 = vshrl.u32 %v264, 16
      %v610 = vrot.slane %v608, 4
      %v611 = vor.u32 %v610, %v606
      %v612 = vrot.slane %v611, 4
      %v614 = vshll.u32 %v265, 16
      %v616 = vrot.slane %v614, 5
      %v617 = vsel %vm281, %v612, %v616
      %v619 = vshrl.u32 %v266, 16
      %v621 = vrot.slane %v619, 4
      %v622 = vshll.u32 %v266, 16
      %v624 = vrot.slane %v622, 5
      %v625 = vor.u32 %v621, %v624
      %v626 = vrot.slane %v625, 4
      %v628 = vshll.u32 %v267, 16
      %v630 = vrot.slane %v628, 5
      %v631 = vsel %vm281, %v626, %v630
      %v632 = vshrl.u32 %v267, 16
      %v634 = vrot.slane %v632, 4
      %v635 = vor.u32 %v634, %v630
      %v636 = vrot.slane %v635, 4
      %v638 = vshll.u32 %v268, 16
      %v640 = vrot.slane %v638, 5
      %v641 = vsel %vm281, %v636, %v640
      %v643 = vshrl.u32 %v269, 16
      %v645 = vrot.slane %v643, 4
      %v646 = vshll.u32 %v269, 16
      %v648 = vrot.slane %v646, 5
      %v649 = vor.u32 %v645, %v648
      %v650 = vrot.slane %v649, 4
      %v652 = vshll.u32 %v270, 16
      %v654 = vrot.slane %v652, 5
      %v655 = vsel %vm281, %v650, %v654
      %v656 = vshrl.u32 %v270, 16
      %v658 = vrot.slane %v656, 4
      %v659 = vor.u32 %v658, %v654
      %v660 = vrot.slane %v659, 4
      %v662 = vshll.u32 %v271, 16
      %v664 = vrot.slane %v662, 5
      %v665 = vsel %vm281, %v660, %v664
      %s666 = scalar_lea.vmem %s210, 2
      %v667 = vld [vmem:[%s666] sm:$0x3]
      %v668 = vunpack.c.l.b16 %v295
      %v669 = vunpack.c.l.b16 %v305
      %v670 = vunpack.c.l.b16 %v319
      %v671 = vunpack.c.l.b16 %v329
      %v672 = vunpack.c.l.b16 %v343
      %v673 = vunpack.c.l.b16 %v353
      %v674 = vunpack.c.l.b16 %v367
      %v675 = vunpack.c.l.b16 %v377
      %v676 = vunpack.c.l.b16 %v391
      %v677 = vunpack.c.l.b16 %v401
      %v678 = vunpack.c.l.b16 %v415
      %v679 = vunpack.c.l.b16 %v425
      %v680 = vunpack.c.l.b16 %v439
      %v681 = vunpack.c.l.b16 %v449
      %v682 = vunpack.c.l.b16 %v463
      %v683 = vunpack.c.l.b16 %v473
      %v684 = vunpack.c.l.b16 %v487
      %v685 = vunpack.c.l.b16 %v497
      %v686 = vunpack.c.l.b16 %v511
      %v687 = vunpack.c.l.b16 %v521
      %v688 = vunpack.c.l.b16 %v535
      %v689 = vunpack.c.l.b16 %v545
      %v690 = vunpack.c.l.b16 %v559
      %v691 = vunpack.c.l.b16 %v569
      %v692 = vunpack.c.l.b16 %v583
      %v693 = vunpack.c.l.b16 %v593
      %v694 = vunpack.c.l.b16 %v607
      %v695 = vunpack.c.l.b16 %v617
      %v696 = vunpack.c.l.b16 %v631
      %v697 = vunpack.c.l.b16 %v641
      %v698 = vunpack.c.l.b16 %v655
      %v699 = vunpack.c.l.b16 %v665
      %v700 = vpack.c.b16 %v669, %v668
      %v701 = vpack.c.b16 %v671, %v670
      %v702 = vpack.c.b16 %v673, %v672
      %v703 = vpack.c.b16 %v675, %v674
      %v704 = vpack.c.b16 %v677, %v676
      %v705 = vpack.c.b16 %v679, %v678
      %v706 = vpack.c.b16 %v681, %v680
      %v707 = vpack.c.b16 %v683, %v682
      %v708 = vpack.c.b16 %v685, %v684
      %v709 = vpack.c.b16 %v687, %v686
      %v710 = vpack.c.b16 %v689, %v688
      %v711 = vpack.c.b16 %v691, %v690
      %v712 = vpack.c.b16 %v693, %v692
      %v713 = vpack.c.b16 %v695, %v694
      %v714 = vpack.c.b16 %v697, %v696
      %v715 = vpack.c.b16 %v699, %v698
      %vm716 = vcmask 31744
      %v718 = vsel %vm716, %v700, 0
      %v721 = vsel %vm716, %v701, 0
      %v724 = vsel %vm716, %v702, 0
      %v727 = vsel %vm716, %v703, 0
      %v730 = vsel %vm716, %v704, 0
      %v733 = vsel %vm716, %v705, 0
      %v736 = vsel %vm716, %v706, 0
      %v739 = vsel %vm716, %v707, 0
      %v742 = vsel %vm716, %v708, 0
      %v745 = vsel %vm716, %v709, 0
      %v748 = vsel %vm716, %v710, 0
      %v751 = vsel %vm716, %v711, 0
      %v754 = vsel %vm716, %v712, 0
      %v757 = vsel %vm716, %v713, 0
      %v760 = vsel %vm716, %v714, 0
      %v763 = vsel %vm716, %v715, 0
      %vm765 = vcmask 1041408
      %v767 = vsel %vm765, %v667, 0
      %769 = vmatprep.subr.bf16.mxu0 0
      %770 = vmatpush1.bf16.msra.mxu0 %v767
      %771 = vmatprep.subr.bf16.mxu0 0
      %772 = vmatpush1.bf16.msra.mxu0 0
      %773 = vmatprep.subr.bf16.mxu0 0
      %774 = vmatpush1.bf16.msra.mxu0 0
      %775 = vmatprep.subr.bf16.mxu0 0
      %776 = vmatpush1.bf16.msra.mxu0 0
      %777 = vmatprep.subr.bf16.mxu0 0
      %778 = vmatpush1.bf16.msra.mxu0 0
      %779 = vmatprep.subr.bf16.mxu0 0
      %780 = vmatpush1.bf16.msra.mxu0 0
      %781 = vmatprep.subr.bf16.mxu0 0
      %782 = vmatpush1.bf16.msra.mxu0 0
      %783 = vmatprep.subr.bf16.mxu0 0
      %784 = vmatpush1.bf16.msra.mxu0 0
      %785 = vmatprep.subr.bf16.mxu0 0
      %786 = vmatpush1.bf16.msra.mxu0 0
      %787 = vmatprep.subr.bf16.mxu0 0
      %788 = vmatpush1.bf16.msra.mxu0 0
      %789 = vmatprep.subr.bf16.mxu0 0
      %790 = vmatpush1.bf16.msra.mxu0 0
      %791 = vmatprep.subr.bf16.mxu0 0
      %792 = vmatpush1.bf16.msra.mxu0 0
      %793 = vmatprep.subr.bf16.mxu0 0
      %794 = vmatpush1.bf16.msra.mxu0 0
      %795 = vmatprep.subr.bf16.mxu0 0
      %796 = vmatpush1.bf16.msra.mxu0 0
      %797 = vmatprep.subr.bf16.mxu0 0
      %798 = vmatpush1.bf16.msra.mxu0 0
      %799 = vmatprep.subr.bf16.mxu0 0
      %800 = vmatpush1.bf16.msra.mxu0 0
      %801 = vmatprep.mubr.bf16.mxu0 0
      %802 = vmatmul.mubr.bf16.gmra.mrb[0].mxu0 %v718
      %v803 = vpop.f32.mrb[0].mxu0
      %v804 = vadd.f32 0.0, %v803
      %v805 = vpop.f32.mrb[0].mxu0
      %v806 = vpop.f32.mrb[0].mxu0
      %v807 = vadd.f32 0.0, %v806
      %v808 = vpop.f32.mrb[0].mxu0
      %809 = vmatprep.mubr.bf16.mxu0 0
      %810 = vmatmul.mubr.bf16.gmra.mrb[0].mxu0 %v721
      %v811 = vpop.f32.mrb[0].mxu0
      %v812 = vadd.f32 0.0, %v811
      %v813 = vpop.f32.mrb[0].mxu0
      %v814 = vpop.f32.mrb[0].mxu0
      %v815 = vadd.f32 0.0, %v814
      %v816 = vpop.f32.mrb[0].mxu0
      %817 = vmatprep.mubr.bf16.mxu0 0
      %818 = vmatmul.mubr.bf16.gmra.mrb[0].mxu0 %v724
      %v819 = vpop.f32.mrb[0].mxu0
      %v820 = vadd.f32 0.0, %v819
      %v821 = vpop.f32.mrb[0].mxu0
      %v822 = vpop.f32.mrb[0].mxu0
      %v823 = vadd.f32 0.0, %v822
      %v824 = vpop.f32.mrb[0].mxu0
      %825 = vmatprep.mubr.bf16.mxu0 0
      %826 = vmatmul.mubr.bf16.gmra.mrb[0].mxu0 %v727
      %v827 = vpop.f32.mrb[0].mxu0
      %v828 = vadd.f32 0.0, %v827
      %v829 = vpop.f32.mrb[0].mxu0
      %v830 = vpop.f32.mrb[0].mxu0
      %v831 = vadd.f32 0.0, %v830
      %v832 = vpop.f32.mrb[0].mxu0
      %833 = vmatprep.mubr.bf16.mxu0 0
      %834 = vmatmul.mubr.bf16.gmra.mrb[0].mxu0 %v730
      %v835 = vpop.f32.mrb[0].mxu0
      %v836 = vadd.f32 0.0, %v835
      %v837 = vpop.f32.mrb[0].mxu0
      %v838 = vpop.f32.mrb[0].mxu0
      %v839 = vadd.f32 0.0, %v838
      %v840 = vpop.f32.mrb[0].mxu0
      %841 = vmatprep.mubr.bf16.mxu0 0
      %842 = vmatmul.mubr.bf16.gmra.mrb[0].mxu0 %v733
      %v843 = vpop.f32.mrb[0].mxu0
      %v844 = vadd.f32 0.0, %v843
      %v845 = vpop.f32.mrb[0].mxu0
      %v846 = vpop.f32.mrb[0].mxu0
      %v847 = vadd.f32 0.0, %v846
      %v848 = vpop.f32.mrb[0].mxu0
      %849 = vmatprep.mubr.bf16.mxu0 0
      %850 = vmatmul.mubr.bf16.gmra.mrb[0].mxu0 %v736
      %v851 = vpop.f32.mrb[0].mxu0
      %v852 = vadd.f32 0.0, %v851
      %v853 = vpop.f32.mrb[0].mxu0
      %v854 = vpop.f32.mrb[0].mxu0
      %v855 = vadd.f32 0.0, %v854
      %v856 = vpop.f32.mrb[0].mxu0
      %857 = vmatprep.mubr.bf16.mxu0 0
      %858 = vmatmul.mubr.bf16.gmra.mrb[0].mxu0 %v739
      %v859 = vpop.f32.mrb[0].mxu0
      %v860 = vadd.f32 0.0, %v859
      %v861 = vpop.f32.mrb[0].mxu0
      %v862 = vpop.f32.mrb[0].mxu0
      %v863 = vadd.f32 0.0, %v862
      %v864 = vpop.f32.mrb[0].mxu0
      %865 = vmatprep.mubr.bf16.mxu0 0
      %866 = vmatmul.mubr.bf16.gmra.mrb[0].mxu0 %v742
      %v867 = vpop.f32.mrb[0].mxu0
      %v868 = vadd.f32 0.0, %v867
      %v869 = vpop.f32.mrb[0].mxu0
      %v870 = vpop.f32.mrb[0].mxu0
      %v871 = vadd.f32 0.0, %v870
      %v872 = vpop.f32.mrb[0].mxu0
      %873 = vmatprep.mubr.bf16.mxu0 0
      %874 = vmatmul.mubr.bf16.gmra.mrb[0].mxu0 %v745
      %v875 = vpop.f32.mrb[0].mxu0
      %v876 = vadd.f32 0.0, %v875
      %v877 = vpop.f32.mrb[0].mxu0
      %v878 = vpop.f32.mrb[0].mxu0
      %v879 = vadd.f32 0.0, %v878
      %v880 = vpop.f32.mrb[0].mxu0
      %881 = vmatprep.mubr.bf16.mxu0 0
      %882 = vmatmul.mubr.bf16.gmra.mrb[0].mxu0 %v748
      %v883 = vpop.f32.mrb[0].mxu0
      %v884 = vadd.f32 0.0, %v883
      %v885 = vpop.f32.mrb[0].mxu0
      %v886 = vpop.f32.mrb[0].mxu0
      %v887 = vadd.f32 0.0, %v886
      %v888 = vpop.f32.mrb[0].mxu0
      %889 = vmatprep.mubr.bf16.mxu0 0
      %890 = vmatmul.mubr.bf16.gmra.mrb[0].mxu0 %v751
      %v891 = vpop.f32.mrb[0].mxu0
      %v892 = vadd.f32 0.0, %v891
      %v893 = vpop.f32.mrb[0].mxu0
      %v894 = vpop.f32.mrb[0].mxu0
      %v895 = vadd.f32 0.0, %v894
      %v896 = vpop.f32.mrb[0].mxu0
      %897 = vmatprep.mubr.bf16.mxu0 0
      %898 = vmatmul.mubr.bf16.gmra.mrb[0].mxu0 %v754
      %v899 = vpop.f32.mrb[0].mxu0
      %v900 = vadd.f32 0.0, %v899
      %v901 = vpop.f32.mrb[0].mxu0
      %v902 = vpop.f32.mrb[0].mxu0
      %v903 = vadd.f32 0.0, %v902
      %v904 = vpop.f32.mrb[0].mxu0
      %905 = vmatprep.mubr.bf16.mxu0 0
      %906 = vmatmul.mubr.bf16.gmra.mrb[0].mxu0 %v757
      %v907 = vpop.f32.mrb[0].mxu0
      %v908 = vadd.f32 0.0, %v907
      %v909 = vpop.f32.mrb[0].mxu0
      %v910 = vpop.f32.mrb[0].mxu0
      %v911 = vadd.f32 0.0, %v910
      %v912 = vpop.f32.mrb[0].mxu0
      %913 = vmatprep.mubr.bf16.mxu0 0
      %914 = vmatmul.mubr.bf16.gmra.mrb[0].mxu0 %v760
      %v915 = vpop.f32.mrb[0].mxu0
      %v916 = vadd.f32 0.0, %v915
      %v917 = vpop.f32.mrb[0].mxu0
      %v918 = vpop.f32.mrb[0].mxu0
      %v919 = vadd.f32 0.0, %v918
      %v920 = vpop.f32.mrb[0].mxu0
      %921 = vmatprep.mubr.bf16.mxu0 0
      %922 = vmatmul.mubr.bf16.gmra.mrb[0].mxu0 %v763
      %v923 = vpop.f32.mrb[0].mxu0
      %v924 = vadd.f32 0.0, %v923
      %v925 = vpop.f32.mrb[0].mxu0
      %v926 = vpop.f32.mrb[0].mxu0
      %v927 = vadd.f32 0.0, %v926
      %v928 = vpop.f32.mrb[0].mxu0
      %929 = vdwg.mxu0
      %v962 = vunpack.c.l.b16 %v224
      %v963 = vunpack.c.l.b16 %v225
      %v964 = vunpack.c.l.b16 %v227
      %v965 = vunpack.c.l.b16 %v228
      %v966 = vunpack.c.l.b16 %v230
      %v967 = vunpack.c.l.b16 %v231
      %v968 = vunpack.c.l.b16 %v233
      %v969 = vunpack.c.l.b16 %v234
      %v970 = vunpack.c.l.b16 %v236
      %v971 = vunpack.c.l.b16 %v237
      %v972 = vunpack.c.l.b16 %v239
      %v973 = vunpack.c.l.b16 %v240
      %v974 = vunpack.c.l.b16 %v242
      %v975 = vunpack.c.l.b16 %v243
      %v976 = vunpack.c.l.b16 %v245
      %v977 = vunpack.c.l.b16 %v246
      %v978 = vunpack.c.l.b16 %v248
      %v979 = vunpack.c.l.b16 %v249
      %v980 = vunpack.c.l.b16 %v251
      %v981 = vunpack.c.l.b16 %v252
      %v982 = vunpack.c.l.b16 %v254
      %v983 = vunpack.c.l.b16 %v255
      %v984 = vunpack.c.l.b16 %v257
      %v985 = vunpack.c.l.b16 %v258
      %v986 = vunpack.c.l.b16 %v260
      %v987 = vunpack.c.l.b16 %v261
      %v988 = vunpack.c.l.b16 %v263
      %v989 = vunpack.c.l.b16 %v264
      %v990 = vunpack.c.l.b16 %v266
      %v991 = vunpack.c.l.b16 %v267
      %v992 = vunpack.c.l.b16 %v269
      %v993 = vunpack.c.l.b16 %v270
      %v994 = vpack.c.b16 %v963, %v962
      %v995 = vpack.c.b16 %v965, %v964
      %v996 = vpack.c.b16 %v967, %v966
      %v997 = vpack.c.b16 %v969, %v968
      %v998 = vpack.c.b16 %v971, %v970
      %v999 = vpack.c.b16 %v973, %v972
      %v1000 = vpack.c.b16 %v975, %v974
      %v1001 = vpack.c.b16 %v977, %v976
      %v1002 = vpack.c.b16 %v979, %v978
      %v1003 = vpack.c.b16 %v981, %v980
      %v1004 = vpack.c.b16 %v983, %v982
      %v1005 = vpack.c.b16 %v985, %v984
      %v1006 = vpack.c.b16 %v987, %v986
      %v1007 = vpack.c.b16 %v989, %v988
      %v1008 = vpack.c.b16 %v991, %v990
      %v1009 = vpack.c.b16 %v993, %v992
      %v1011 = vsel %vm716, %v994, 0
      %v1014 = vsel %vm716, %v995, 0
      %v1017 = vsel %vm716, %v996, 0
      %v1020 = vsel %vm716, %v997, 0
      %v1023 = vsel %vm716, %v998, 0
      %v1026 = vsel %vm716, %v999, 0
      %v1029 = vsel %vm716, %v1000, 0
      %v1032 = vsel %vm716, %v1001, 0
      %v1035 = vsel %vm716, %v1002, 0
      %v1038 = vsel %vm716, %v1003, 0
      %v1041 = vsel %vm716, %v1004, 0
      %v1044 = vsel %vm716, %v1005, 0
      %v1047 = vsel %vm716, %v1006, 0
      %v1050 = vsel %vm716, %v1007, 0
      %v1053 = vsel %vm716, %v1008, 0
      %v1056 = vsel %vm716, %v1009, 0
      %v1059 = vsel %vm765, %v278, 0
      %1061 = vmatprep.subr.bf16.mxu0 0
      %1062 = vmatpush1.bf16.msra.mxu0 %v1059
      %1063 = vmatprep.subr.bf16.mxu0 0
      %1064 = vmatpush1.bf16.msra.mxu0 0
      %1065 = vmatprep.subr.bf16.mxu0 0
      %1066 = vmatpush1.bf16.msra.mxu0 0
      %1067 = vmatprep.subr.bf16.mxu0 0
      %1068 = vmatpush1.bf16.msra.mxu0 0
      %1069 = vmatprep.subr.bf16.mxu0 0
      %1070 = vmatpush1.bf16.msra.mxu0 0
      %1071 = vmatprep.subr.bf16.mxu0 0
      %1072 = vmatpush1.bf16.msra.mxu0 0
      %1073 = vmatprep.subr.bf16.mxu0 0
      %1074 = vmatpush1.bf16.msra.mxu0 0
      %1075 = vmatprep.subr.bf16.mxu0 0
      %1076 = vmatpush1.bf16.msra.mxu0 0
      %1077 = vmatprep.subr.bf16.mxu0 0
      %1078 = vmatpush1.bf16.msra.mxu0 0
      %1079 = vmatprep.subr.bf16.mxu0 0
      %1080 = vmatpush1.bf16.msra.mxu0 0
      %1081 = vmatprep.subr.bf16.mxu0 0
      %1082 = vmatpush1.bf16.msra.mxu0 0
      %1083 = vmatprep.subr.bf16.mxu0 0
      %1084 = vmatpush1.bf16.msra.mxu0 0
      %1085 = vmatprep.subr.bf16.mxu0 0
      %1086 = vmatpush1.bf16.msra.mxu0 0
      %1087 = vmatprep.subr.bf16.mxu0 0
      %1088 = vmatpush1.bf16.msra.mxu0 0
      %1089 = vmatprep.subr.bf16.mxu0 0
      %1090 = vmatpush1.bf16.msra.mxu0 0
      %1091 = vmatprep.subr.bf16.mxu0 0
      %1092 = vmatpush1.bf16.msra.mxu0 0
      %1093 = vmatprep.mubr.bf16.mxu0 0
      %1094 = vmatmul.mubr.bf16.gmra.mrb[0].mxu0 %v1011
      %v1095 = vpop.f32.mrb[0].mxu0
      %v1096 = vadd.f32 %v804, %v1095
      %v1097 = vpop.f32.mrb[0].mxu0
      %v1098 = vpop.f32.mrb[0].mxu0
      %v1099 = vadd.f32 %v807, %v1098
      %v1100 = vpop.f32.mrb[0].mxu0
      %1101 = vmatprep.mubr.bf16.mxu0 0
      %1102 = vmatmul.mubr.bf16.gmra.mrb[0].mxu0 %v1014
      %v1103 = vpop.f32.mrb[0].mxu0
      %v1104 = vadd.f32 %v812, %v1103
      %v1105 = vpop.f32.mrb[0].mxu0
      %v1106 = vpop.f32.mrb[0].mxu0
      %v1107 = vadd.f32 %v815, %v1106
      %v1108 = vpop.f32.mrb[0].mxu0
      %1109 = vmatprep.mubr.bf16.mxu0 0
      %1110 = vmatmul.mubr.bf16.gmra.mrb[0].mxu0 %v1017
      %v1111 = vpop.f32.mrb[0].mxu0
      %v1112 = vadd.f32 %v820, %v1111
      %v1113 = vpop.f32.mrb[0].mxu0
      %v1114 = vpop.f32.mrb[0].mxu0
      %v1115 = vadd.f32 %v823, %v1114
      %v1116 = vpop.f32.mrb[0].mxu0
      %1117 = vmatprep.mubr.bf16.mxu0 0
      %1118 = vmatmul.mubr.bf16.gmra.mrb[0].mxu0 %v1020
      %v1119 = vpop.f32.mrb[0].mxu0
      %v1120 = vadd.f32 %v828, %v1119
      %v1121 = vpop.f32.mrb[0].mxu0
      %v1122 = vpop.f32.mrb[0].mxu0
      %v1123 = vadd.f32 %v831, %v1122
      %v1124 = vpop.f32.mrb[0].mxu0
      %1125 = vmatprep.mubr.bf16.mxu0 0
      %1126 = vmatmul.mubr.bf16.gmra.mrb[0].mxu0 %v1023
      %v1127 = vpop.f32.mrb[0].mxu0
      %v1128 = vadd.f32 %v836, %v1127
      %v1129 = vpop.f32.mrb[0].mxu0
      %v1130 = vpop.f32.mrb[0].mxu0
      %v1131 = vadd.f32 %v839, %v1130
      %v1132 = vpop.f32.mrb[0].mxu0
      %1133 = vmatprep.mubr.bf16.mxu0 0
      %1134 = vmatmul.mubr.bf16.gmra.mrb[0].mxu0 %v1026
      %v1135 = vpop.f32.mrb[0].mxu0
      %v1136 = vadd.f32 %v844, %v1135
      %v1137 = vpop.f32.mrb[0].mxu0
      %v1138 = vpop.f32.mrb[0].mxu0
      %v1139 = vadd.f32 %v847, %v1138
      %v1140 = vpop.f32.mrb[0].mxu0
      %1141 = vmatprep.mubr.bf16.mxu0 0
      %1142 = vmatmul.mubr.bf16.gmra.mrb[0].mxu0 %v1029
      %v1143 = vpop.f32.mrb[0].mxu0
      %v1144 = vadd.f32 %v852, %v1143
      %v1145 = vpop.f32.mrb[0].mxu0
      %v1146 = vpop.f32.mrb[0].mxu0
      %v1147 = vadd.f32 %v855, %v1146
      %v1148 = vpop.f32.mrb[0].mxu0
      %1149 = vmatprep.mubr.bf16.mxu0 0
      %1150 = vmatmul.mubr.bf16.gmra.mrb[0].mxu0 %v1032
      %v1151 = vpop.f32.mrb[0].mxu0
      %v1152 = vadd.f32 %v860, %v1151
      %v1153 = vpop.f32.mrb[0].mxu0
      %v1154 = vpop.f32.mrb[0].mxu0
      %v1155 = vadd.f32 %v863, %v1154
      %v1156 = vpop.f32.mrb[0].mxu0
      %1157 = vmatprep.mubr.bf16.mxu0 0
      %1158 = vmatmul.mubr.bf16.gmra.mrb[0].mxu0 %v1035
      %v1159 = vpop.f32.mrb[0].mxu0
      %v1160 = vadd.f32 %v868, %v1159
      %v1161 = vpop.f32.mrb[0].mxu0
      %v1162 = vpop.f32.mrb[0].mxu0
      %v1163 = vadd.f32 %v871, %v1162
      %v1164 = vpop.f32.mrb[0].mxu0
      %1165 = vmatprep.mubr.bf16.mxu0 0
      %1166 = vmatmul.mubr.bf16.gmra.mrb[0].mxu0 %v1038
      %v1167 = vpop.f32.mrb[0].mxu0
      %v1168 = vadd.f32 %v876, %v1167
      %v1169 = vpop.f32.mrb[0].mxu0
      %v1170 = vpop.f32.mrb[0].mxu0
      %v1171 = vadd.f32 %v879, %v1170
      %v1172 = vpop.f32.mrb[0].mxu0
      %1173 = vmatprep.mubr.bf16.mxu0 0
      %1174 = vmatmul.mubr.bf16.gmra.mrb[0].mxu0 %v1041
      %v1175 = vpop.f32.mrb[0].mxu0
      %v1176 = vadd.f32 %v884, %v1175
      %v1177 = vpop.f32.mrb[0].mxu0
      %v1178 = vpop.f32.mrb[0].mxu0
      %v1179 = vadd.f32 %v887, %v1178
      %v1180 = vpop.f32.mrb[0].mxu0
      %1181 = vmatprep.mubr.bf16.mxu0 0
      %1182 = vmatmul.mubr.bf16.gmra.mrb[0].mxu0 %v1044
      %v1183 = vpop.f32.mrb[0].mxu0
      %v1184 = vadd.f32 %v892, %v1183
      %v1185 = vpop.f32.mrb[0].mxu0
      %v1186 = vpop.f32.mrb[0].mxu0
      %v1187 = vadd.f32 %v895, %v1186
      %v1188 = vpop.f32.mrb[0].mxu0
      %1189 = vmatprep.mubr.bf16.mxu0 0
      %1190 = vmatmul.mubr.bf16.gmra.mrb[0].mxu0 %v1047
      %v1191 = vpop.f32.mrb[0].mxu0
      %v1192 = vadd.f32 %v900, %v1191
      %v1193 = vpop.f32.mrb[0].mxu0
      %v1194 = vpop.f32.mrb[0].mxu0
      %v1195 = vadd.f32 %v903, %v1194
      %v1196 = vpop.f32.mrb[0].mxu0
      %1197 = vmatprep.mubr.bf16.mxu0 0
      %1198 = vmatmul.mubr.bf16.gmra.mrb[0].mxu0 %v1050
      %v1199 = vpop.f32.mrb[0].mxu0
      %v1200 = vadd.f32 %v908, %v1199
      %v1201 = vpop.f32.mrb[0].mxu0
      %v1202 = vpop.f32.mrb[0].mxu0
      %v1203 = vadd.f32 %v911, %v1202
      %v1204 = vpop.f32.mrb[0].mxu0
      %1205 = vmatprep.mubr.bf16.mxu0 0
      %1206 = vmatmul.mubr.bf16.gmra.mrb[0].mxu0 %v1053
      %v1207 = vpop.f32.mrb[0].mxu0
      %v1208 = vadd.f32 %v916, %v1207
      %v1209 = vpop.f32.mrb[0].mxu0
      %v1210 = vpop.f32.mrb[0].mxu0
      %v1211 = vadd.f32 %v919, %v1210
      %v1212 = vpop.f32.mrb[0].mxu0
      %1213 = vmatprep.mubr.bf16.mxu0 0
      %1214 = vmatmul.mubr.bf16.gmra.mrb[0].mxu0 %v1056
      %v1215 = vpop.f32.mrb[0].mxu0
      %v1216 = vadd.f32 %v924, %v1215
      %v1217 = vpop.f32.mrb[0].mxu0
      %v1218 = vpop.f32.mrb[0].mxu0
      %v1219 = vadd.f32 %v927, %v1218
      %v1220 = vpop.f32.mrb[0].mxu0
      %1221 = vdwg.mxu0
      %vm1238 = vcmask 1042432
      %vm1239 = vcmask 1046532
      %vm1240 = vmor %vm1238, %vm1239
      %v1241 = vrot.slane %v224, 5
      %v1242 = vrot.slane %v1241, 4
      %v1243 = vrot.slane %v225, 5
      %v1244 = vsel %vm1240, %v1242, %v1243
      %v1245 = vrot.slane %v1243, 4
      %v1246 = vrot.slane %v226, 5
      %v1247 = vsel %vm1240, %v1245, %v1246
      %v1248 = vrot.slane %v227, 5
      %v1249 = vrot.slane %v1248, 4
      %v1250 = vrot.slane %v228, 5
      %v1251 = vsel %vm1240, %v1249, %v1250
      %v1252 = vrot.slane %v1250, 4
      %v1253 = vrot.slane %v229, 5
      %v1254 = vsel %vm1240, %v1252, %v1253
      %v1255 = vrot.slane %v230, 5
      %v1256 = vrot.slane %v1255, 4
      %v1257 = vrot.slane %v231, 5
      %v1258 = vsel %vm1240, %v1256, %v1257
      %v1259 = vrot.slane %v1257, 4
      %v1260 = vrot.slane %v232, 5
      %v1261 = vsel %vm1240, %v1259, %v1260
      %v1262 = vrot.slane %v233, 5
      %v1263 = vrot.slane %v1262, 4
      %v1264 = vrot.slane %v234, 5
      %v1265 = vsel %vm1240, %v1263, %v1264
      %v1266 = vrot.slane %v1264, 4
      %v1267 = vrot.slane %v235, 5
      %v1268 = vsel %vm1240, %v1266, %v1267
      %v1269 = vrot.slane %v236, 5
      %v1270 = vrot.slane %v1269, 4
      %v1271 = vrot.slane %v237, 5
      %v1272 = vsel %vm1240, %v1270, %v1271
      %v1273 = vrot.slane %v1271, 4
      %v1274 = vrot.slane %v238, 5
      %v1275 = vsel %vm1240, %v1273, %v1274
      %v1276 = vrot.slane %v239, 5
      %v1277 = vrot.slane %v1276, 4
      %v1278 = vrot.slane %v240, 5
      %v1279 = vsel %vm1240, %v1277, %v1278
      %v1280 = vrot.slane %v1278, 4
      %v1281 = vrot.slane %v241, 5
      %v1282 = vsel %vm1240, %v1280, %v1281
      %v1283 = vrot.slane %v242, 5
      %v1284 = vrot.slane %v1283, 4
      %v1285 = vrot.slane %v243, 5
      %v1286 = vsel %vm1240, %v1284, %v1285
      %v1287 = vrot.slane %v1285, 4
      %v1288 = vrot.slane %v244, 5
      %v1289 = vsel %vm1240, %v1287, %v1288
      %v1290 = vrot.slane %v245, 5
      %v1291 = vrot.slane %v1290, 4
      %v1292 = vrot.slane %v246, 5
      %v1293 = vsel %vm1240, %v1291, %v1292
      %v1294 = vrot.slane %v1292, 4
      %v1295 = vrot.slane %v247, 5
      %v1296 = vsel %vm1240, %v1294, %v1295
      %v1297 = vrot.slane %v248, 5
      %v1298 = vrot.slane %v1297, 4
      %v1299 = vrot.slane %v249, 5
      %v1300 = vsel %vm1240, %v1298, %v1299
      %v1301 = vrot.slane %v1299, 4
      %v1302 = vrot.slane %v250, 5
      %v1303 = vsel %vm1240, %v1301, %v1302
      %v1304 = vrot.slane %v251, 5
      %v1305 = vrot.slane %v1304, 4
      %v1306 = vrot.slane %v252, 5
      %v1307 = vsel %vm1240, %v1305, %v1306
      %v1308 = vrot.slane %v1306, 4
      %v1309 = vrot.slane %v253, 5
      %v1310 = vsel %vm1240, %v1308, %v1309
      %v1311 = vrot.slane %v254, 5
      %v1312 = vrot.slane %v1311, 4
      %v1313 = vrot.slane %v255, 5
      %v1314 = vsel %vm1240, %v1312, %v1313
      %v1315 = vrot.slane %v1313, 4
      %v1316 = vrot.slane %v256, 5
      %v1317 = vsel %vm1240, %v1315, %v1316
      %v1318 = vrot.slane %v257, 5
      %v1319 = vrot.slane %v1318, 4
      %v1320 = vrot.slane %v258, 5
      %v1321 = vsel %vm1240, %v1319, %v1320
      %v1322 = vrot.slane %v1320, 4
      %v1323 = vrot.slane %v259, 5
      %v1324 = vsel %vm1240, %v1322, %v1323
      %v1325 = vrot.slane %v260, 5
      %v1326 = vrot.slane %v1325, 4
      %v1327 = vrot.slane %v261, 5
      %v1328 = vsel %vm1240, %v1326, %v1327
      %v1329 = vrot.slane %v1327, 4
      %v1330 = vrot.slane %v262, 5
      %v1331 = vsel %vm1240, %v1329, %v1330
      %v1332 = vrot.slane %v263, 5
      %v1333 = vrot.slane %v1332, 4
      %v1334 = vrot.slane %v264, 5
      %v1335 = vsel %vm1240, %v1333, %v1334
      %v1336 = vrot.slane %v1334, 4
      %v1337 = vrot.slane %v265, 5
      %v1338 = vsel %vm1240, %v1336, %v1337
      %v1339 = vrot.slane %v266, 5
      %v1340 = vrot.slane %v1339, 4
      %v1341 = vrot.slane %v267, 5
      %v1342 = vsel %vm1240, %v1340, %v1341
      %v1343 = vrot.slane %v1341, 4
      %v1344 = vrot.slane %v268, 5
      %v1345 = vsel %vm1240, %v1343, %v1344
      %v1346 = vrot.slane %v269, 5
      %v1347 = vrot.slane %v1346, 4
      %v1348 = vrot.slane %v270, 5
      %v1349 = vsel %vm1240, %v1347, %v1348
      %v1350 = vrot.slane %v1348, 4
      %v1351 = vrot.slane %v271, 5
      %v1352 = vsel %vm1240, %v1350, %v1351
      %s1353 = scalar_lea.vmem %s210, 4
      %v1354 = vld [vmem:[%s1353] sm:$0x3]
      %v1355 = vunpack.c.l.b16 %v1244
      %v1356 = vunpack.c.l.b16 %v1247
      %v1357 = vunpack.c.l.b16 %v1251
      %v1358 = vunpack.c.l.b16 %v1254
      %v1359 = vunpack.c.l.b16 %v1258
      %v1360 = vunpack.c.l.b16 %v1261
      %v1361 = vunpack.c.l.b16 %v1265
      %v1362 = vunpack.c.l.b16 %v1268
      %v1363 = vunpack.c.l.b16 %v1272
      %v1364 = vunpack.c.l.b16 %v1275
      %v1365 = vunpack.c.l.b16 %v1279
      %v1366 = vunpack.c.l.b16 %v1282
      %v1367 = vunpack.c.l.b16 %v1286
      %v1368 = vunpack.c.l.b16 %v1289
      %v1369 = vunpack.c.l.b16 %v1293
      %v1370 = vunpack.c.l.b16 %v1296
      %v1371 = vunpack.c.l.b16 %v1300
      %v1372 = vunpack.c.l.b16 %v1303
      %v1373 = vunpack.c.l.b16 %v1307
      %v1374 = vunpack.c.l.b16 %v1310
      %v1375 = vunpack.c.l.b16 %v1314
      %v1376 = vunpack.c.l.b16 %v1317
      %v1377 = vunpack.c.l.b16 %v1321
      %v1378 = vunpack.c.l.b16 %v1324
      %v1379 = vunpack.c.l.b16 %v1328
      %v1380 = vunpack.c.l.b16 %v1331
      %v1381 = vunpack.c.l.b16 %v1335
      %v1382 = vunpack.c.l.b16 %v1338
      %v1383 = vunpack.c.l.b16 %v1342
      %v1384 = vunpack.c.l.b16 %v1345
      %v1385 = vunpack.c.l.b16 %v1349
      %v1386 = vunpack.c.l.b16 %v1352
      %v1387 = vpack.c.b16 %v1356, %v1355
      %v1388 = vpack.c.b16 %v1358, %v1357
      %v1389 = vpack.c.b16 %v1360, %v1359
      %v1390 = vpack.c.b16 %v1362, %v1361
      %v1391 = vpack.c.b16 %v1364, %v1363
      %v1392 = vpack.c.b16 %v1366, %v1365
      %v1393 = vpack.c.b16 %v1368, %v1367
      %v1394 = vpack.c.b16 %v1370, %v1369
      %v1395 = vpack.c.b16 %v1372, %v1371
      %v1396 = vpack.c.b16 %v1374, %v1373
      %v1397 = vpack.c.b16 %v1376, %v1375
      %v1398 = vpack.c.b16 %v1378, %v1377
      %v1399 = vpack.c.b16 %v1380, %v1379
      %v1400 = vpack.c.b16 %v1382, %v1381
      %v1401 = vpack.c.b16 %v1384, %v1383
      %v1402 = vpack.c.b16 %v1386, %v1385
      %v1404 = vsel %vm716, %v1387, 0
      %v1407 = vsel %vm716, %v1388, 0
      %v1410 = vsel %vm716, %v1389, 0
      %v1413 = vsel %vm716, %v1390, 0
      %v1416 = vsel %vm716, %v1391, 0
      %v1419 = vsel %vm716, %v1392, 0
      %v1422 = vsel %vm716, %v1393, 0
      %v1425 = vsel %vm716, %v1394, 0
      %v1428 = vsel %vm716, %v1395, 0
      %v1431 = vsel %vm716, %v1396, 0
      %v1434 = vsel %vm716, %v1397, 0
      %v1437 = vsel %vm716, %v1398, 0
      %v1440 = vsel %vm716, %v1399, 0
      %v1443 = vsel %vm716, %v1400, 0
      %v1446 = vsel %vm716, %v1401, 0
      %v1449 = vsel %vm716, %v1402, 0
      %v1452 = vsel %vm765, %v1354, 0
      %1454 = vmatprep.subr.bf16.mxu0 0
      %1455 = vmatpush1.bf16.msra.mxu0 %v1452
      %1456 = vmatprep.subr.bf16.mxu0 0
      %1457 = vmatpush1.bf16.msra.mxu0 0
      %1458 = vmatprep.subr.bf16.mxu0 0
      %1459 = vmatpush1.bf16.msra.mxu0 0
      %1460 = vmatprep.subr.bf16.mxu0 0
      %1461 = vmatpush1.bf16.msra.mxu0 0
      %1462 = vmatprep.subr.bf16.mxu0 0
      %1463 = vmatpush1.bf16.msra.mxu0 0
      %1464 = vmatprep.subr.bf16.mxu0 0
      %1465 = vmatpush1.bf16.msra.mxu0 0
      %1466 = vmatprep.subr.bf16.mxu0 0
      %1467 = vmatpush1.bf16.msra.mxu0 0
      %1468 = vmatprep.subr.bf16.mxu0 0
      %1469 = vmatpush1.bf16.msra.mxu0 0
      %1470 = vmatprep.subr.bf16.mxu0 0
      %1471 = vmatpush1.bf16.msra.mxu0 0
      %1472 = vmatprep.subr.bf16.mxu0 0
      %1473 = vmatpush1.bf16.msra.mxu0 0
      %1474 = vmatprep.subr.bf16.mxu0 0
      %1475 = vmatpush1.bf16.msra.mxu0 0
      %1476 = vmatprep.subr.bf16.mxu0 0
      %1477 = vmatpush1.bf16.msra.mxu0 0
      %1478 = vmatprep.subr.bf16.mxu0 0
      %1479 = vmatpush1.bf16.msra.mxu0 0
      %1480 = vmatprep.subr.bf16.mxu0 0
      %1481 = vmatpush1.bf16.msra.mxu0 0
      %1482 = vmatprep.subr.bf16.mxu0 0
      %1483 = vmatpush1.bf16.msra.mxu0 0
      %1484 = vmatprep.subr.bf16.mxu0 0
      %1485 = vmatpush1.bf16.msra.mxu0 0
      %1486 = vmatprep.mubr.bf16.mxu0 0
      %1487 = vmatmul.mubr.bf16.gmra.mrb[0].mxu0 %v1404
      %v1488 = vpop.f32.mrb[0].mxu0
      %v1489 = vadd.f32 0.0, %v1488
      %v1490 = vpop.f32.mrb[0].mxu0
      %v1491 = vpop.f32.mrb[0].mxu0
      %v1492 = vadd.f32 0.0, %v1491
      %v1493 = vpop.f32.mrb[0].mxu0
      %1494 = vmatprep.mubr.bf16.mxu0 0
      %1495 = vmatmul.mubr.bf16.gmra.mrb[0].mxu0 %v1407
      %v1496 = vpop.f32.mrb[0].mxu0
      %v1497 = vadd.f32 0.0, %v1496
      %v1498 = vpop.f32.mrb[0].mxu0
      %v1499 = vpop.f32.mrb[0].mxu0
      %v1500 = vadd.f32 0.0, %v1499
      %v1501 = vpop.f32.mrb[0].mxu0
      %1502 = vmatprep.mubr.bf16.mxu0 0
      %1503 = vmatmul.mubr.bf16.gmra.mrb[0].mxu0 %v1410
      %v1504 = vpop.f32.mrb[0].mxu0
      %v1505 = vadd.f32 0.0, %v1504
      %v1506 = vpop.f32.mrb[0].mxu0
      %v1507 = vpop.f32.mrb[0].mxu0
      %v1508 = vadd.f32 0.0, %v1507
      %v1509 = vpop.f32.mrb[0].mxu0
      %1510 = vmatprep.mubr.bf16.mxu0 0
      %1511 = vmatmul.mubr.bf16.gmra.mrb[0].mxu0 %v1413
      %v1512 = vpop.f32.mrb[0].mxu0
      %v1513 = vadd.f32 0.0, %v1512
      %v1514 = vpop.f32.mrb[0].mxu0
      %v1515 = vpop.f32.mrb[0].mxu0
      %v1516 = vadd.f32 0.0, %v1515
      %v1517 = vpop.f32.mrb[0].mxu0
      %1518 = vmatprep.mubr.bf16.mxu0 0
      %1519 = vmatmul.mubr.bf16.gmra.mrb[0].mxu0 %v1416
      %v1520 = vpop.f32.mrb[0].mxu0
      %v1521 = vadd.f32 0.0, %v1520
      %v1522 = vpop.f32.mrb[0].mxu0
      %v1523 = vpop.f32.mrb[0].mxu0
      %v1524 = vadd.f32 0.0, %v1523
      %v1525 = vpop.f32.mrb[0].mxu0
      %1526 = vmatprep.mubr.bf16.mxu0 0
      %1527 = vmatmul.mubr.bf16.gmra.mrb[0].mxu0 %v1419
      %v1528 = vpop.f32.mrb[0].mxu0
      %v1529 = vadd.f32 0.0, %v1528
      %v1530 = vpop.f32.mrb[0].mxu0
      %v1531 = vpop.f32.mrb[0].mxu0
      %v1532 = vadd.f32 0.0, %v1531
      %v1533 = vpop.f32.mrb[0].mxu0
      %1534 = vmatprep.mubr.bf16.mxu0 0
      %1535 = vmatmul.mubr.bf16.gmra.mrb[0].mxu0 %v1422
      %v1536 = vpop.f32.mrb[0].mxu0
      %v1537 = vadd.f32 0.0, %v1536
      %v1538 = vpop.f32.mrb[0].mxu0
      %v1539 = vpop.f32.mrb[0].mxu0
      %v1540 = vadd.f32 0.0, %v1539
      %v1541 = vpop.f32.mrb[0].mxu0
      %1542 = vmatprep.mubr.bf16.mxu0 0
      %1543 = vmatmul.mubr.bf16.gmra.mrb[0].mxu0 %v1425
      %v1544 = vpop.f32.mrb[0].mxu0
      %v1545 = vadd.f32 0.0, %v1544
      %v1546 = vpop.f32.mrb[0].mxu0
      %v1547 = vpop.f32.mrb[0].mxu0
      %v1548 = vadd.f32 0.0, %v1547
      %v1549 = vpop.f32.mrb[0].mxu0
      %1550 = vmatprep.mubr.bf16.mxu0 0
      %1551 = vmatmul.mubr.bf16.gmra.mrb[0].mxu0 %v1428
      %v1552 = vpop.f32.mrb[0].mxu0
      %v1553 = vadd.f32 0.0, %v1552
      %v1554 = vpop.f32.mrb[0].mxu0
      %v1555 = vpop.f32.mrb[0].mxu0
      %v1556 = vadd.f32 0.0, %v1555
      %v1557 = vpop.f32.mrb[0].mxu0
      %1558 = vmatprep.mubr.bf16.mxu0 0
      %1559 = vmatmul.mubr.bf16.gmra.mrb[0].mxu0 %v1431
      %v1560 = vpop.f32.mrb[0].mxu0
      %v1561 = vadd.f32 0.0, %v1560
      %v1562 = vpop.f32.mrb[0].mxu0
      %v1563 = vpop.f32.mrb[0].mxu0
      %v1564 = vadd.f32 0.0, %v1563
      %v1565 = vpop.f32.mrb[0].mxu0
      %1566 = vmatprep.mubr.bf16.mxu0 0
      %1567 = vmatmul.mubr.bf16.gmra.mrb[0].mxu0 %v1434
      %v1568 = vpop.f32.mrb[0].mxu0
      %v1569 = vadd.f32 0.0, %v1568
      %v1570 = vpop.f32.mrb[0].mxu0
      %v1571 = vpop.f32.mrb[0].mxu0
      %v1572 = vadd.f32 0.0, %v1571
      %v1573 = vpop.f32.mrb[0].mxu0
      %1574 = vmatprep.mubr.bf16.mxu0 0
      %1575 = vmatmul.mubr.bf16.gmra.mrb[0].mxu0 %v1437
      %v1576 = vpop.f32.mrb[0].mxu0
      %v1577 = vadd.f32 0.0, %v1576
      %v1578 = vpop.f32.mrb[0].mxu0
      %v1579 = vpop.f32.mrb[0].mxu0
      %v1580 = vadd.f32 0.0, %v1579
      %v1581 = vpop.f32.mrb[0].mxu0
      %1582 = vmatprep.mubr.bf16.mxu0 0
      %1583 = vmatmul.mubr.bf16.gmra.mrb[0].mxu0 %v1440
      %v1584 = vpop.f32.mrb[0].mxu0
      %v1585 = vadd.f32 0.0, %v1584
      %v1586 = vpop.f32.mrb[0].mxu0
      %v1587 = vpop.f32.mrb[0].mxu0
      %v1588 = vadd.f32 0.0, %v1587
      %v1589 = vpop.f32.mrb[0].mxu0
      %1590 = vmatprep.mubr.bf16.mxu0 0
      %1591 = vmatmul.mubr.bf16.gmra.mrb[0].mxu0 %v1443
      %v1592 = vpop.f32.mrb[0].mxu0
      %v1593 = vadd.f32 0.0, %v1592
      %v1594 = vpop.f32.mrb[0].mxu0
      %v1595 = vpop.f32.mrb[0].mxu0
      %v1596 = vadd.f32 0.0, %v1595
      %v1597 = vpop.f32.mrb[0].mxu0
      %1598 = vmatprep.mubr.bf16.mxu0 0
      %1599 = vmatmul.mubr.bf16.gmra.mrb[0].mxu0 %v1446
      %v1600 = vpop.f32.mrb[0].mxu0
      %v1601 = vadd.f32 0.0, %v1600
      %v1602 = vpop.f32.mrb[0].mxu0
      %v1603 = vpop.f32.mrb[0].mxu0
      %v1604 = vadd.f32 0.0, %v1603
      %v1605 = vpop.f32.mrb[0].mxu0
      %1606 = vmatprep.mubr.bf16.mxu0 0
      %1607 = vmatmul.mubr.bf16.gmra.mrb[0].mxu0 %v1449
      %v1608 = vpop.f32.mrb[0].mxu0
      %v1609 = vadd.f32 0.0, %v1608
      %v1610 = vpop.f32.mrb[0].mxu0
      %v1611 = vpop.f32.mrb[0].mxu0
      %v1612 = vadd.f32 0.0, %v1611
      %v1613 = vpop.f32.mrb[0].mxu0
      %1614 = vdwg.mxu0
      %v1615 = vadd.f32 %v1096, %v1489
      %v1616 = vadd.f32 %v1099, %v1492
      %v1617 = vadd.f32 %v1104, %v1497
      %v1618 = vadd.f32 %v1107, %v1500
      %v1619 = vadd.f32 %v1112, %v1505
      %v1620 = vadd.f32 %v1115, %v1508
      %v1621 = vadd.f32 %v1120, %v1513
      %v1622 = vadd.f32 %v1123, %v1516
      %v1623 = vadd.f32 %v1128, %v1521
      %v1624 = vadd.f32 %v1131, %v1524
      %v1625 = vadd.f32 %v1136, %v1529
      %v1626 = vadd.f32 %v1139, %v1532
      %v1627 = vadd.f32 %v1144, %v1537
      %v1628 = vadd.f32 %v1147, %v1540
      %v1629 = vadd.f32 %v1152, %v1545
      %v1630 = vadd.f32 %v1155, %v1548
      %v1631 = vadd.f32 %v1160, %v1553
      %v1632 = vadd.f32 %v1163, %v1556
      %v1633 = vadd.f32 %v1168, %v1561
      %v1634 = vadd.f32 %v1171, %v1564
      %v1635 = vadd.f32 %v1176, %v1569
      %v1636 = vadd.f32 %v1179, %v1572
      %v1637 = vadd.f32 %v1184, %v1577
      %v1638 = vadd.f32 %v1187, %v1580
      %v1639 = vadd.f32 %v1192, %v1585
      %v1640 = vadd.f32 %v1195, %v1588
      %v1641 = vadd.f32 %v1200, %v1593
      %v1642 = vadd.f32 %v1203, %v1596
      %v1643 = vadd.f32 %v1208, %v1601
      %v1644 = vadd.f32 %v1211, %v1604
      %v1645 = vadd.f32 %v1216, %v1609
      %v1646 = vadd.f32 %v1219, %v1612
      %s1647 = scalar_lea.vmem %s210, 6
      %v1648 = vld [vmem:[%s1647] sm:$0x3]
      %v1651 = vunpack.c.l.b16 %v272
      %v1652 = vunpack.c.l.b16 %v273
      %v1653 = vpack.c.b16 %v1652, %v1651
      %v1655 = vsel %vm716, %v1653, 0
      %v1658 = vsel %vm765, %v1648, 0
      %1660 = vmatprep.subr.bf16.mxu0 0
      %1661 = vmatpush1.bf16.msra.mxu0 %v1658
      %1662 = vmatprep.subr.bf16.mxu0 0
      %1663 = vmatpush1.bf16.msra.mxu0 0
      %1664 = vmatprep.subr.bf16.mxu0 0
      %1665 = vmatpush1.bf16.msra.mxu0 0
      %1666 = vmatprep.subr.bf16.mxu0 0
      %1667 = vmatpush1.bf16.msra.mxu0 0
      %1668 = vmatprep.subr.bf16.mxu0 0
      %1669 = vmatpush1.bf16.msra.mxu0 0
      %1670 = vmatprep.subr.bf16.mxu0 0
      %1671 = vmatpush1.bf16.msra.mxu0 0
      %1672 = vmatprep.subr.bf16.mxu0 0
      %1673 = vmatpush1.bf16.msra.mxu0 0
      %1674 = vmatprep.subr.bf16.mxu0 0
      %1675 = vmatpush1.bf16.msra.mxu0 0
      %1676 = vmatprep.subr.bf16.mxu0 0
      %1677 = vmatpush1.bf16.msra.mxu0 0
      %1678 = vmatprep.subr.bf16.mxu0 0
      %1679 = vmatpush1.bf16.msra.mxu0 0
      %1680 = vmatprep.subr.bf16.mxu0 0
      %1681 = vmatpush1.bf16.msra.mxu0 0
      %1682 = vmatprep.subr.bf16.mxu0 0
      %1683 = vmatpush1.bf16.msra.mxu0 0
      %1684 = vmatprep.subr.bf16.mxu0 0
      %1685 = vmatpush1.bf16.msra.mxu0 0
      %1686 = vmatprep.subr.bf16.mxu0 0
      %1687 = vmatpush1.bf16.msra.mxu0 0
      %1688 = vmatprep.subr.bf16.mxu0 0
      %1689 = vmatpush1.bf16.msra.mxu0 0
      %1690 = vmatprep.subr.bf16.mxu0 0
      %1691 = vmatpush1.bf16.msra.mxu0 0
      %1692 = vmatprep.mubr.bf16.mxu0 0
      %1693 = vmatmul.mubr.bf16.gmra.mrb[0].mxu0 %v1014
      %v1694 = vpop.f32.mrb[0].mxu0
      %v1695 = vadd.f32 0.0, %v1694
      %v1696 = vpop.f32.mrb[0].mxu0
      %v1697 = vpop.f32.mrb[0].mxu0
      %v1698 = vadd.f32 0.0, %v1697
      %v1699 = vpop.f32.mrb[0].mxu0
      %1700 = vmatprep.mubr.bf16.mxu0 0
      %1701 = vmatmul.mubr.bf16.gmra.mrb[0].mxu0 %v1017
      %v1702 = vpop.f32.mrb[0].mxu0
      %v1703 = vadd.f32 0.0, %v1702
      %v1704 = vpop.f32.mrb[0].mxu0
      %v1705 = vpop.f32.mrb[0].mxu0
      %v1706 = vadd.f32 0.0, %v1705
      %v1707 = vpop.f32.mrb[0].mxu0
      %1708 = vmatprep.mubr.bf16.mxu0 0
      %1709 = vmatmul.mubr.bf16.gmra.mrb[0].mxu0 %v1020
      %v1710 = vpop.f32.mrb[0].mxu0
      %v1711 = vadd.f32 0.0, %v1710
      %v1712 = vpop.f32.mrb[0].mxu0
      %v1713 = vpop.f32.mrb[0].mxu0
      %v1714 = vadd.f32 0.0, %v1713
      %v1715 = vpop.f32.mrb[0].mxu0
      %1716 = vmatprep.mubr.bf16.mxu0 0
      %1717 = vmatmul.mubr.bf16.gmra.mrb[0].mxu0 %v1023
      %v1718 = vpop.f32.mrb[0].mxu0
      %v1719 = vadd.f32 0.0, %v1718
      %v1720 = vpop.f32.mrb[0].mxu0
      %v1721 = vpop.f32.mrb[0].mxu0
      %v1722 = vadd.f32 0.0, %v1721
      %v1723 = vpop.f32.mrb[0].mxu0
      %1724 = vmatprep.mubr.bf16.mxu0 0
      %1725 = vmatmul.mubr.bf16.gmra.mrb[0].mxu0 %v1026
      %v1726 = vpop.f32.mrb[0].mxu0
      %v1727 = vadd.f32 0.0, %v1726
      %v1728 = vpop.f32.mrb[0].mxu0
      %v1729 = vpop.f32.mrb[0].mxu0
      %v1730 = vadd.f32 0.0, %v1729
      %v1731 = vpop.f32.mrb[0].mxu0
      %1732 = vmatprep.mubr.bf16.mxu0 0
      %1733 = vmatmul.mubr.bf16.gmra.mrb[0].mxu0 %v1029
      %v1734 = vpop.f32.mrb[0].mxu0
      %v1735 = vadd.f32 0.0, %v1734
      %v1736 = vpop.f32.mrb[0].mxu0
      %v1737 = vpop.f32.mrb[0].mxu0
      %v1738 = vadd.f32 0.0, %v1737
      %v1739 = vpop.f32.mrb[0].mxu0
      %1740 = vmatprep.mubr.bf16.mxu0 0
      %1741 = vmatmul.mubr.bf16.gmra.mrb[0].mxu0 %v1032
      %v1742 = vpop.f32.mrb[0].mxu0
      %v1743 = vadd.f32 0.0, %v1742
      %v1744 = vpop.f32.mrb[0].mxu0
      %v1745 = vpop.f32.mrb[0].mxu0
      %v1746 = vadd.f32 0.0, %v1745
      %v1747 = vpop.f32.mrb[0].mxu0
      %1748 = vmatprep.mubr.bf16.mxu0 0
      %1749 = vmatmul.mubr.bf16.gmra.mrb[0].mxu0 %v1035
      %v1750 = vpop.f32.mrb[0].mxu0
      %v1751 = vadd.f32 0.0, %v1750
      %v1752 = vpop.f32.mrb[0].mxu0
      %v1753 = vpop.f32.mrb[0].mxu0
      %v1754 = vadd.f32 0.0, %v1753
      %v1755 = vpop.f32.mrb[0].mxu0
      %1756 = vmatprep.mubr.bf16.mxu0 0
      %1757 = vmatmul.mubr.bf16.gmra.mrb[0].mxu0 %v1038
      %v1758 = vpop.f32.mrb[0].mxu0
      %v1759 = vadd.f32 0.0, %v1758
      %v1760 = vpop.f32.mrb[0].mxu0
      %v1761 = vpop.f32.mrb[0].mxu0
      %v1762 = vadd.f32 0.0, %v1761
      %v1763 = vpop.f32.mrb[0].mxu0
      %1764 = vmatprep.mubr.bf16.mxu0 0
      %1765 = vmatmul.mubr.bf16.gmra.mrb[0].mxu0 %v1041
      %v1766 = vpop.f32.mrb[0].mxu0
      %v1767 = vadd.f32 0.0, %v1766
      %v1768 = vpop.f32.mrb[0].mxu0
      %v1769 = vpop.f32.mrb[0].mxu0
      %v1770 = vadd.f32 0.0, %v1769
      %v1771 = vpop.f32.mrb[0].mxu0
      %1772 = vmatprep.mubr.bf16.mxu0 0
      %1773 = vmatmul.mubr.bf16.gmra.mrb[0].mxu0 %v1044
      %v1774 = vpop.f32.mrb[0].mxu0
      %v1775 = vadd.f32 0.0, %v1774
      %v1776 = vpop.f32.mrb[0].mxu0
      %v1777 = vpop.f32.mrb[0].mxu0
      %v1778 = vadd.f32 0.0, %v1777
      %v1779 = vpop.f32.mrb[0].mxu0
      %1780 = vmatprep.mubr.bf16.mxu0 0
      %1781 = vmatmul.mubr.bf16.gmra.mrb[0].mxu0 %v1047
      %v1782 = vpop.f32.mrb[0].mxu0
      %v1783 = vadd.f32 0.0, %v1782
      %v1784 = vpop.f32.mrb[0].mxu0
      %v1785 = vpop.f32.mrb[0].mxu0
      %v1786 = vadd.f32 0.0, %v1785
      %v1787 = vpop.f32.mrb[0].mxu0
      %1788 = vmatprep.mubr.bf16.mxu0 0
      %1789 = vmatmul.mubr.bf16.gmra.mrb[0].mxu0 %v1050
      %v1790 = vpop.f32.mrb[0].mxu0
      %v1791 = vadd.f32 0.0, %v1790
      %v1792 = vpop.f32.mrb[0].mxu0
      %v1793 = vpop.f32.mrb[0].mxu0
      %v1794 = vadd.f32 0.0, %v1793
      %v1795 = vpop.f32.mrb[0].mxu0
      %1796 = vmatprep.mubr.bf16.mxu0 0
      %1797 = vmatmul.mubr.bf16.gmra.mrb[0].mxu0 %v1053
      %v1798 = vpop.f32.mrb[0].mxu0
      %v1799 = vadd.f32 0.0, %v1798
      %v1800 = vpop.f32.mrb[0].mxu0
      %v1801 = vpop.f32.mrb[0].mxu0
      %v1802 = vadd.f32 0.0, %v1801
      %v1803 = vpop.f32.mrb[0].mxu0
      %1804 = vmatprep.mubr.bf16.mxu0 0
      %1805 = vmatmul.mubr.bf16.gmra.mrb[0].mxu0 %v1056
      %v1806 = vpop.f32.mrb[0].mxu0
      %v1807 = vadd.f32 0.0, %v1806
      %v1808 = vpop.f32.mrb[0].mxu0
      %v1809 = vpop.f32.mrb[0].mxu0
      %v1810 = vadd.f32 0.0, %v1809
      %v1811 = vpop.f32.mrb[0].mxu0
      %1812 = vmatprep.mubr.bf16.mxu0 0
      %1813 = vmatmul.mubr.bf16.gmra.mrb[0].mxu0 %v1655
      %v1814 = vpop.f32.mrb[0].mxu0
      %v1815 = vadd.f32 0.0, %v1814
      %v1816 = vpop.f32.mrb[0].mxu0
      %v1817 = vpop.f32.mrb[0].mxu0
      %v1818 = vadd.f32 0.0, %v1817
      %v1819 = vpop.f32.mrb[0].mxu0
      %1820 = vdwg.mxu0
      %v1821 = vadd.f32 %v1615, %v1695
      %v1822 = vadd.f32 %v1616, %v1698
      %v1823 = vadd.f32 %v1617, %v1703
      %v1824 = vadd.f32 %v1618, %v1706
      %v1825 = vadd.f32 %v1619, %v1711
      %v1826 = vadd.f32 %v1620, %v1714
      %v1827 = vadd.f32 %v1621, %v1719
      %v1828 = vadd.f32 %v1622, %v1722
      %v1829 = vadd.f32 %v1623, %v1727
      %v1830 = vadd.f32 %v1624, %v1730
      %v1831 = vadd.f32 %v1625, %v1735
      %v1832 = vadd.f32 %v1626, %v1738
      %v1833 = vadd.f32 %v1627, %v1743
      %v1834 = vadd.f32 %v1628, %v1746
      %v1835 = vadd.f32 %v1629, %v1751
      %v1836 = vadd.f32 %v1630, %v1754
      %v1837 = vadd.f32 %v1631, %v1759
      %v1838 = vadd.f32 %v1632, %v1762
      %v1839 = vadd.f32 %v1633, %v1767
      %v1840 = vadd.f32 %v1634, %v1770
      %v1841 = vadd.f32 %v1635, %v1775
      %v1842 = vadd.f32 %v1636, %v1778
      %v1843 = vadd.f32 %v1637, %v1783
      %v1844 = vadd.f32 %v1638, %v1786
      %v1845 = vadd.f32 %v1639, %v1791
      %v1846 = vadd.f32 %v1640, %v1794
      %v1847 = vadd.f32 %v1641, %v1799
      %v1848 = vadd.f32 %v1642, %v1802
      %v1849 = vadd.f32 %v1643, %v1807
      %v1850 = vadd.f32 %v1644, %v1810
      %v1851 = vadd.f32 %v1645, %v1815
      %v1852 = vadd.f32 %v1646, %v1818
      %v1854 = vshrl.u32 %v272, 16
      %v1856 = vrot.slane %v1854, 4
      %v1857 = vshll.u32 %v272, 16
      %v1859 = vrot.slane %v1857, 5
      %v1860 = vor.u32 %v1856, %v1859
      %v1861 = vrot.slane %v1860, 4
      %v1863 = vshll.u32 %v273, 16
      %v1865 = vrot.slane %v1863, 5
      %v1866 = vsel %vm281, %v1861, %v1865
      %v1867 = vshrl.u32 %v273, 16
      %v1869 = vrot.slane %v1867, 4
      %v1870 = vor.u32 %v1869, %v1865
      %v1871 = vrot.slane %v1870, 4
      %v1873 = vshll.u32 %v274, 16
      %v1875 = vrot.slane %v1873, 5
      %v1876 = vsel %vm281, %v1871, %v1875
      %s1877 = scalar_lea.vmem %s210, 8
      %v1878 = vld [vmem:[%s1877] sm:$0x3]
      %v1879 = vunpack.c.l.b16 %v1866
      %v1880 = vunpack.c.l.b16 %v1876
      %v1881 = vpack.c.b16 %v1880, %v1879
      %v1883 = vsel %vm716, %v1881, 0
      %v1886 = vsel %vm765, %v1878, 0
      %1888 = vmatprep.subr.bf16.mxu0 0
      %1889 = vmatpush1.bf16.msra.mxu0 %v1886
      %1890 = vmatprep.subr.bf16.mxu0 0
      %1891 = vmatpush1.bf16.msra.mxu0 0
      %1892 = vmatprep.subr.bf16.mxu0 0
      %1893 = vmatpush1.bf16.msra.mxu0 0
      %1894 = vmatprep.subr.bf16.mxu0 0
      %1895 = vmatpush1.bf16.msra.mxu0 0
      %1896 = vmatprep.subr.bf16.mxu0 0
      %1897 = vmatpush1.bf16.msra.mxu0 0
      %1898 = vmatprep.subr.bf16.mxu0 0
      %1899 = vmatpush1.bf16.msra.mxu0 0
      %1900 = vmatprep.subr.bf16.mxu0 0
      %1901 = vmatpush1.bf16.msra.mxu0 0
      %1902 = vmatprep.subr.bf16.mxu0 0
      %1903 = vmatpush1.bf16.msra.mxu0 0
      %1904 = vmatprep.subr.bf16.mxu0 0
      %1905 = vmatpush1.bf16.msra.mxu0 0
      %1906 = vmatprep.subr.bf16.mxu0 0
      %1907 = vmatpush1.bf16.msra.mxu0 0
      %1908 = vmatprep.subr.bf16.mxu0 0
      %1909 = vmatpush1.bf16.msra.mxu0 0
      %1910 = vmatprep.subr.bf16.mxu0 0
      %1911 = vmatpush1.bf16.msra.mxu0 0
      %1912 = vmatprep.subr.bf16.mxu0 0
      %1913 = vmatpush1.bf16.msra.mxu0 0
      %1914 = vmatprep.subr.bf16.mxu0 0
      %1915 = vmatpush1.bf16.msra.mxu0 0
      %1916 = vmatprep.subr.bf16.mxu0 0
      %1917 = vmatpush1.bf16.msra.mxu0 0
      %1918 = vmatprep.subr.bf16.mxu0 0
      %1919 = vmatpush1.bf16.msra.mxu0 0
      %1920 = vmatprep.mubr.bf16.mxu0 0
      %1921 = vmatmul.mubr.bf16.gmra.mrb[0].mxu0 %v721
      %v1922 = vpop.f32.mrb[0].mxu0
      %v1923 = vadd.f32 0.0, %v1922
      %v1924 = vpop.f32.mrb[0].mxu0
      %v1925 = vpop.f32.mrb[0].mxu0
      %v1926 = vadd.f32 0.0, %v1925
      %v1927 = vpop.f32.mrb[0].mxu0
      %1928 = vmatprep.mubr.bf16.mxu0 0
      %1929 = vmatmul.mubr.bf16.gmra.mrb[0].mxu0 %v724
      %v1930 = vpop.f32.mrb[0].mxu0
      %v1931 = vadd.f32 0.0, %v1930
      %v1932 = vpop.f32.mrb[0].mxu0
      %v1933 = vpop.f32.mrb[0].mxu0
      %v1934 = vadd.f32 0.0, %v1933
      %v1935 = vpop.f32.mrb[0].mxu0
      %1936 = vmatprep.mubr.bf16.mxu0 0
      %1937 = vmatmul.mubr.bf16.gmra.mrb[0].mxu0 %v727
      %v1938 = vpop.f32.mrb[0].mxu0
      %v1939 = vadd.f32 0.0, %v1938
      %v1940 = vpop.f32.mrb[0].mxu0
      %v1941 = vpop.f32.mrb[0].mxu0
      %v1942 = vadd.f32 0.0, %v1941
      %v1943 = vpop.f32.mrb[0].mxu0
      %1944 = vmatprep.mubr.bf16.mxu0 0
      %1945 = vmatmul.mubr.bf16.gmra.mrb[0].mxu0 %v730
      %v1946 = vpop.f32.mrb[0].mxu0
      %v1947 = vadd.f32 0.0, %v1946
      %v1948 = vpop.f32.mrb[0].mxu0
      %v1949 = vpop.f32.mrb[0].mxu0
      %v1950 = vadd.f32 0.0, %v1949
      %v1951 = vpop.f32.mrb[0].mxu0
      %1952 = vmatprep.mubr.bf16.mxu0 0
      %1953 = vmatmul.mubr.bf16.gmra.mrb[0].mxu0 %v733
      %v1954 = vpop.f32.mrb[0].mxu0
      %v1955 = vadd.f32 0.0, %v1954
      %v1956 = vpop.f32.mrb[0].mxu0
      %v1957 = vpop.f32.mrb[0].mxu0
      %v1958 = vadd.f32 0.0, %v1957
      %v1959 = vpop.f32.mrb[0].mxu0
      %1960 = vmatprep.mubr.bf16.mxu0 0
      %1961 = vmatmul.mubr.bf16.gmra.mrb[0].mxu0 %v736
      %v1962 = vpop.f32.mrb[0].mxu0
      %v1963 = vadd.f32 0.0, %v1962
      %v1964 = vpop.f32.mrb[0].mxu0
      %v1965 = vpop.f32.mrb[0].mxu0
      %v1966 = vadd.f32 0.0, %v1965
      %v1967 = vpop.f32.mrb[0].mxu0
      %1968 = vmatprep.mubr.bf16.mxu0 0
      %1969 = vmatmul.mubr.bf16.gmra.mrb[0].mxu0 %v739
      %v1970 = vpop.f32.mrb[0].mxu0
      %v1971 = vadd.f32 0.0, %v1970
      %v1972 = vpop.f32.mrb[0].mxu0
      %v1973 = vpop.f32.mrb[0].mxu0
      %v1974 = vadd.f32 0.0, %v1973
      %v1975 = vpop.f32.mrb[0].mxu0
      %1976 = vmatprep.mubr.bf16.mxu0 0
      %1977 = vmatmul.mubr.bf16.gmra.mrb[0].mxu0 %v742
      %v1978 = vpop.f32.mrb[0].mxu0
      %v1979 = vadd.f32 0.0, %v1978
      %v1980 = vpop.f32.mrb[0].mxu0
      %v1981 = vpop.f32.mrb[0].mxu0
      %v1982 = vadd.f32 0.0, %v1981
      %v1983 = vpop.f32.mrb[0].mxu0
      %1984 = vmatprep.mubr.bf16.mxu0 0
      %1985 = vmatmul.mubr.bf16.gmra.mrb[0].mxu0 %v745
      %v1986 = vpop.f32.mrb[0].mxu0
      %v1987 = vadd.f32 0.0, %v1986
      %v1988 = vpop.f32.mrb[0].mxu0
      %v1989 = vpop.f32.mrb[0].mxu0
      %v1990 = vadd.f32 0.0, %v1989
      %v1991 = vpop.f32.mrb[0].mxu0
      %1992 = vmatprep.mubr.bf16.mxu0 0
      %1993 = vmatmul.mubr.bf16.gmra.mrb[0].mxu0 %v748
      %v1994 = vpop.f32.mrb[0].mxu0
      %v1995 = vadd.f32 0.0, %v1994
      %v1996 = vpop.f32.mrb[0].mxu0
      %v1997 = vpop.f32.mrb[0].mxu0
      %v1998 = vadd.f32 0.0, %v1997
      %v1999 = vpop.f32.mrb[0].mxu0
      %2000 = vmatprep.mubr.bf16.mxu0 0
      %2001 = vmatmul.mubr.bf16.gmra.mrb[0].mxu0 %v751
      %v2002 = vpop.f32.mrb[0].mxu0
      %v2003 = vadd.f32 0.0, %v2002
      %v2004 = vpop.f32.mrb[0].mxu0
      %v2005 = vpop.f32.mrb[0].mxu0
      %v2006 = vadd.f32 0.0, %v2005
      %v2007 = vpop.f32.mrb[0].mxu0
      %2008 = vmatprep.mubr.bf16.mxu0 0
      %2009 = vmatmul.mubr.bf16.gmra.mrb[0].mxu0 %v754
      %v2010 = vpop.f32.mrb[0].mxu0
      %v2011 = vadd.f32 0.0, %v2010
      %v2012 = vpop.f32.mrb[0].mxu0
      %v2013 = vpop.f32.mrb[0].mxu0
      %v2014 = vadd.f32 0.0, %v2013
      %v2015 = vpop.f32.mrb[0].mxu0
      %2016 = vmatprep.mubr.bf16.mxu0 0
      %2017 = vmatmul.mubr.bf16.gmra.mrb[0].mxu0 %v757
      %v2018 = vpop.f32.mrb[0].mxu0
      %v2019 = vadd.f32 0.0, %v2018
      %v2020 = vpop.f32.mrb[0].mxu0
      %v2021 = vpop.f32.mrb[0].mxu0
      %v2022 = vadd.f32 0.0, %v2021
      %v2023 = vpop.f32.mrb[0].mxu0
      %2024 = vmatprep.mubr.bf16.mxu0 0
      %2025 = vmatmul.mubr.bf16.gmra.mrb[0].mxu0 %v760
      %v2026 = vpop.f32.mrb[0].mxu0
      %v2027 = vadd.f32 0.0, %v2026
      %v2028 = vpop.f32.mrb[0].mxu0
      %v2029 = vpop.f32.mrb[0].mxu0
      %v2030 = vadd.f32 0.0, %v2029
      %v2031 = vpop.f32.mrb[0].mxu0
      %2032 = vmatprep.mubr.bf16.mxu0 0
      %2033 = vmatmul.mubr.bf16.gmra.mrb[0].mxu0 %v763
      %v2034 = vpop.f32.mrb[0].mxu0
      %v2035 = vadd.f32 0.0, %v2034
      %v2036 = vpop.f32.mrb[0].mxu0
      %v2037 = vpop.f32.mrb[0].mxu0
      %v2038 = vadd.f32 0.0, %v2037
      %v2039 = vpop.f32.mrb[0].mxu0
      %2040 = vmatprep.mubr.bf16.mxu0 0
      %2041 = vmatmul.mubr.bf16.gmra.mrb[0].mxu0 %v1883
      %v2042 = vpop.f32.mrb[0].mxu0
      %v2043 = vadd.f32 0.0, %v2042
      %v2044 = vpop.f32.mrb[0].mxu0
      %v2045 = vpop.f32.mrb[0].mxu0
      %v2046 = vadd.f32 0.0, %v2045
      %v2047 = vpop.f32.mrb[0].mxu0
      %2048 = vdwg.mxu0
      %v2049 = vadd.f32 %v1821, %v1923
      %v2050 = vadd.f32 %v1822, %v1926
      %v2051 = vadd.f32 %v1823, %v1931
      %v2052 = vadd.f32 %v1824, %v1934
      %v2053 = vadd.f32 %v1825, %v1939
      %v2054 = vadd.f32 %v1826, %v1942
      %v2055 = vadd.f32 %v1827, %v1947
      %v2056 = vadd.f32 %v1828, %v1950
      %v2057 = vadd.f32 %v1829, %v1955
      %v2058 = vadd.f32 %v1830, %v1958
      %v2059 = vadd.f32 %v1831, %v1963
      %v2060 = vadd.f32 %v1832, %v1966
      %v2061 = vadd.f32 %v1833, %v1971
      %v2062 = vadd.f32 %v1834, %v1974
      %v2063 = vadd.f32 %v1835, %v1979
      %v2064 = vadd.f32 %v1836, %v1982
      %v2065 = vadd.f32 %v1837, %v1987
      %v2066 = vadd.f32 %v1838, %v1990
      %v2067 = vadd.f32 %v1839, %v1995
      %v2068 = vadd.f32 %v1840, %v1998
      %v2069 = vadd.f32 %v1841, %v2003
      %v2070 = vadd.f32 %v1842, %v2006
      %v2071 = vadd.f32 %v1843, %v2011
      %v2072 = vadd.f32 %v1844, %v2014
      %v2073 = vadd.f32 %v1845, %v2019
      %v2074 = vadd.f32 %v1846, %v2022
      %v2075 = vadd.f32 %v1847, %v2027
      %v2076 = vadd.f32 %v1848, %v2030
      %v2077 = vadd.f32 %v1849, %v2035
      %v2078 = vadd.f32 %v1850, %v2038
      %v2079 = vadd.f32 %v1851, %v2043
      %v2080 = vadd.f32 %v1852, %v2046
      %v2082 = vrot.slane %v272, 5
      %v2083 = vrot.slane %v2082, 4
      %v2084 = vrot.slane %v273, 5
      %v2085 = vsel %vm1240, %v2083, %v2084
      %v2086 = vrot.slane %v2084, 4
      %v2087 = vrot.slane %v274, 5
      %v2088 = vsel %vm1240, %v2086, %v2087
      %s2089 = scalar_lea.vmem %s210, 10
      %v2090 = vld [vmem:[%s2089] sm:$0x3]
      %v2091 = vunpack.c.l.b16 %v2085
      %v2092 = vunpack.c.l.b16 %v2088
      %v2093 = vpack.c.b16 %v2092, %v2091
      %v2095 = vsel %vm716, %v2093, 0
      %v2098 = vsel %vm765, %v2090, 0
      %2100 = vmatprep.subr.bf16.mxu0 0
      %2101 = vmatpush1.bf16.msra.mxu0 %v2098
      %2102 = vmatprep.subr.bf16.mxu0 0
      %2103 = vmatpush1.bf16.msra.mxu0 0
      %2104 = vmatprep.subr.bf16.mxu0 0
      %2105 = vmatpush1.bf16.msra.mxu0 0
      %2106 = vmatprep.subr.bf16.mxu0 0
      %2107 = vmatpush1.bf16.msra.mxu0 0
      %2108 = vmatprep.subr.bf16.mxu0 0
      %2109 = vmatpush1.bf16.msra.mxu0 0
      %2110 = vmatprep.subr.bf16.mxu0 0
      %2111 = vmatpush1.bf16.msra.mxu0 0
      %2112 = vmatprep.subr.bf16.mxu0 0
      %2113 = vmatpush1.bf16.msra.mxu0 0
      %2114 = vmatprep.subr.bf16.mxu0 0
      %2115 = vmatpush1.bf16.msra.mxu0 0
      %2116 = vmatprep.subr.bf16.mxu0 0
      %2117 = vmatpush1.bf16.msra.mxu0 0
      %2118 = vmatprep.subr.bf16.mxu0 0
      %2119 = vmatpush1.bf16.msra.mxu0 0
      %2120 = vmatprep.subr.bf16.mxu0 0
      %2121 = vmatpush1.bf16.msra.mxu0 0
      %2122 = vmatprep.subr.bf16.mxu0 0
      %2123 = vmatpush1.bf16.msra.mxu0 0
      %2124 = vmatprep.subr.bf16.mxu0 0
      %2125 = vmatpush1.bf16.msra.mxu0 0
      %2126 = vmatprep.subr.bf16.mxu0 0
      %2127 = vmatpush1.bf16.msra.mxu0 0
      %2128 = vmatprep.subr.bf16.mxu0 0
      %2129 = vmatpush1.bf16.msra.mxu0 0
      %2130 = vmatprep.subr.bf16.mxu0 0
      %2131 = vmatpush1.bf16.msra.mxu0 0
      %2132 = vmatprep.mubr.bf16.mxu0 0
      %2133 = vmatmul.mubr.bf16.gmra.mrb[0].mxu0 %v1407
      %v2134 = vpop.f32.mrb[0].mxu0
      %v2135 = vadd.f32 0.0, %v2134
      %v2136 = vpop.f32.mrb[0].mxu0
      %v2137 = vpop.f32.mrb[0].mxu0
      %v2138 = vadd.f32 0.0, %v2137
      %v2139 = vpop.f32.mrb[0].mxu0
      %2140 = vmatprep.mubr.bf16.mxu0 0
      %2141 = vmatmul.mubr.bf16.gmra.mrb[0].mxu0 %v1410
      %v2142 = vpop.f32.mrb[0].mxu0
      %v2143 = vadd.f32 0.0, %v2142
      %v2144 = vpop.f32.mrb[0].mxu0
      %v2145 = vpop.f32.mrb[0].mxu0
      %v2146 = vadd.f32 0.0, %v2145
      %v2147 = vpop.f32.mrb[0].mxu0
      %2148 = vmatprep.mubr.bf16.mxu0 0
      %2149 = vmatmul.mubr.bf16.gmra.mrb[0].mxu0 %v1413
      %v2150 = vpop.f32.mrb[0].mxu0
      %v2151 = vadd.f32 0.0, %v2150
      %v2152 = vpop.f32.mrb[0].mxu0
      %v2153 = vpop.f32.mrb[0].mxu0
      %v2154 = vadd.f32 0.0, %v2153
      %v2155 = vpop.f32.mrb[0].mxu0
      %2156 = vmatprep.mubr.bf16.mxu0 0
      %2157 = vmatmul.mubr.bf16.gmra.mrb[0].mxu0 %v1416
      %v2158 = vpop.f32.mrb[0].mxu0
      %v2159 = vadd.f32 0.0, %v2158
      %v2160 = vpop.f32.mrb[0].mxu0
      %v2161 = vpop.f32.mrb[0].mxu0
      %v2162 = vadd.f32 0.0, %v2161
      %v2163 = vpop.f32.mrb[0].mxu0
      %2164 = vmatprep.mubr.bf16.mxu0 0
      %2165 = vmatmul.mubr.bf16.gmra.mrb[0].mxu0 %v1419
      %v2166 = vpop.f32.mrb[0].mxu0
      %v2167 = vadd.f32 0.0, %v2166
      %v2168 = vpop.f32.mrb[0].mxu0
      %v2169 = vpop.f32.mrb[0].mxu0
      %v2170 = vadd.f32 0.0, %v2169
      %v2171 = vpop.f32.mrb[0].mxu0
      %2172 = vmatprep.mubr.bf16.mxu0 0
      %2173 = vmatmul.mubr.bf16.gmra.mrb[0].mxu0 %v1422
      %v2174 = vpop.f32.mrb[0].mxu0
      %v2175 = vadd.f32 0.0, %v2174
      %v2176 = vpop.f32.mrb[0].mxu0
      %v2177 = vpop.f32.mrb[0].mxu0
      %v2178 = vadd.f32 0.0, %v2177
      %v2179 = vpop.f32.mrb[0].mxu0
      %2180 = vmatprep.mubr.bf16.mxu0 0
      %2181 = vmatmul.mubr.bf16.gmra.mrb[0].mxu0 %v1425
      %v2182 = vpop.f32.mrb[0].mxu0
      %v2183 = vadd.f32 0.0, %v2182
      %v2184 = vpop.f32.mrb[0].mxu0
      %v2185 = vpop.f32.mrb[0].mxu0
      %v2186 = vadd.f32 0.0, %v2185
      %v2187 = vpop.f32.mrb[0].mxu0
      %2188 = vmatprep.mubr.bf16.mxu0 0
      %2189 = vmatmul.mubr.bf16.gmra.mrb[0].mxu0 %v1428
      %v2190 = vpop.f32.mrb[0].mxu0
      %v2191 = vadd.f32 0.0, %v2190
      %v2192 = vpop.f32.mrb[0].mxu0
      %v2193 = vpop.f32.mrb[0].mxu0
      %v2194 = vadd.f32 0.0, %v2193
      %v2195 = vpop.f32.mrb[0].mxu0
      %2196 = vmatprep.mubr.bf16.mxu0 0
      %2197 = vmatmul.mubr.bf16.gmra.mrb[0].mxu0 %v1431
      %v2198 = vpop.f32.mrb[0].mxu0
      %v2199 = vadd.f32 0.0, %v2198
      %v2200 = vpop.f32.mrb[0].mxu0
      %v2201 = vpop.f32.mrb[0].mxu0
      %v2202 = vadd.f32 0.0, %v2201
      %v2203 = vpop.f32.mrb[0].mxu0
      %2204 = vmatprep.mubr.bf16.mxu0 0
      %2205 = vmatmul.mubr.bf16.gmra.mrb[0].mxu0 %v1434
      %v2206 = vpop.f32.mrb[0].mxu0
      %v2207 = vadd.f32 0.0, %v2206
      %v2208 = vpop.f32.mrb[0].mxu0
      %v2209 = vpop.f32.mrb[0].mxu0
      %v2210 = vadd.f32 0.0, %v2209
      %v2211 = vpop.f32.mrb[0].mxu0
      %2212 = vmatprep.mubr.bf16.mxu0 0
      %2213 = vmatmul.mubr.bf16.gmra.mrb[0].mxu0 %v1437
      %v2214 = vpop.f32.mrb[0].mxu0
      %v2215 = vadd.f32 0.0, %v2214
      %v2216 = vpop.f32.mrb[0].mxu0
      %v2217 = vpop.f32.mrb[0].mxu0
      %v2218 = vadd.f32 0.0, %v2217
      %v2219 = vpop.f32.mrb[0].mxu0
      %2220 = vmatprep.mubr.bf16.mxu0 0
      %2221 = vmatmul.mubr.bf16.gmra.mrb[0].mxu0 %v1440
      %v2222 = vpop.f32.mrb[0].mxu0
      %v2223 = vadd.f32 0.0, %v2222
      %v2224 = vpop.f32.mrb[0].mxu0
      %v2225 = vpop.f32.mrb[0].mxu0
      %v2226 = vadd.f32 0.0, %v2225
      %v2227 = vpop.f32.mrb[0].mxu0
      %2228 = vmatprep.mubr.bf16.mxu0 0
      %2229 = vmatmul.mubr.bf16.gmra.mrb[0].mxu0 %v1443
      %v2230 = vpop.f32.mrb[0].mxu0
      %v2231 = vadd.f32 0.0, %v2230
      %v2232 = vpop.f32.mrb[0].mxu0
      %v2233 = vpop.f32.mrb[0].mxu0
      %v2234 = vadd.f32 0.0, %v2233
      %v2235 = vpop.f32.mrb[0].mxu0
      %2236 = vmatprep.mubr.bf16.mxu0 0
      %2237 = vmatmul.mubr.bf16.gmra.mrb[0].mxu0 %v1446
      %v2238 = vpop.f32.mrb[0].mxu0
      %v2239 = vadd.f32 0.0, %v2238
      %v2240 = vpop.f32.mrb[0].mxu0
      %v2241 = vpop.f32.mrb[0].mxu0
      %v2242 = vadd.f32 0.0, %v2241
      %v2243 = vpop.f32.mrb[0].mxu0
      %2244 = vmatprep.mubr.bf16.mxu0 0
      %2245 = vmatmul.mubr.bf16.gmra.mrb[0].mxu0 %v1449
      %v2246 = vpop.f32.mrb[0].mxu0
      %v2247 = vadd.f32 0.0, %v2246
      %v2248 = vpop.f32.mrb[0].mxu0
      %v2249 = vpop.f32.mrb[0].mxu0
      %v2250 = vadd.f32 0.0, %v2249
      %v2251 = vpop.f32.mrb[0].mxu0
      %2252 = vmatprep.mubr.bf16.mxu0 0
      %2253 = vmatmul.mubr.bf16.gmra.mrb[0].mxu0 %v2095
      %v2254 = vpop.f32.mrb[0].mxu0
      %v2255 = vadd.f32 0.0, %v2254
      %v2256 = vpop.f32.mrb[0].mxu0
      %v2257 = vpop.f32.mrb[0].mxu0
      %v2258 = vadd.f32 0.0, %v2257
      %v2259 = vpop.f32.mrb[0].mxu0
      %2260 = vdwg.mxu0
      %v2261 = vadd.f32 %v2049, %v2135
      %v2262 = vadd.f32 %v2050, %v2138
      %v2263 = vadd.f32 %v2051, %v2143
      %v2264 = vadd.f32 %v2052, %v2146
      %v2265 = vadd.f32 %v2053, %v2151
      %v2266 = vadd.f32 %v2054, %v2154
      %v2267 = vadd.f32 %v2055, %v2159
      %v2268 = vadd.f32 %v2056, %v2162
      %v2269 = vadd.f32 %v2057, %v2167
      %v2270 = vadd.f32 %v2058, %v2170
      %v2271 = vadd.f32 %v2059, %v2175
      %v2272 = vadd.f32 %v2060, %v2178
      %v2273 = vadd.f32 %v2061, %v2183
      %v2274 = vadd.f32 %v2062, %v2186
      %v2275 = vadd.f32 %v2063, %v2191
      %v2276 = vadd.f32 %v2064, %v2194
      %v2277 = vadd.f32 %v2065, %v2199
      %v2278 = vadd.f32 %v2066, %v2202
      %v2279 = vadd.f32 %v2067, %v2207
      %v2280 = vadd.f32 %v2068, %v2210
      %v2281 = vadd.f32 %v2069, %v2215
      %v2282 = vadd.f32 %v2070, %v2218
      %v2283 = vadd.f32 %v2071, %v2223
      %v2284 = vadd.f32 %v2072, %v2226
      %v2285 = vadd.f32 %v2073, %v2231
      %v2286 = vadd.f32 %v2074, %v2234
      %v2287 = vadd.f32 %v2075, %v2239
      %v2288 = vadd.f32 %v2076, %v2242
      %v2289 = vadd.f32 %v2077, %v2247
      %v2290 = vadd.f32 %v2078, %v2250
      %v2291 = vadd.f32 %v2079, %v2255
      %v2292 = vadd.f32 %v2080, %v2258
      %s2293 = scalar_lea.vmem %s210, 12
      %v2294 = vld [vmem:[%s2293] sm:$0x3]
      %v2297 = vunpack.c.l.b16 %v275
      %v2298 = vunpack.c.l.b16 %v276
      %v2299 = vpack.c.b16 %v2298, %v2297
      %v2301 = vsel %vm716, %v2299, 0
      %v2304 = vsel %vm765, %v2294, 0
      %2306 = vmatprep.subr.bf16.mxu0 0
      %2307 = vmatpush1.bf16.msra.mxu0 %v2304
      %2308 = vmatprep.subr.bf16.mxu0 0
      %2309 = vmatpush1.bf16.msra.mxu0 0
      %2310 = vmatprep.subr.bf16.mxu0 0
      %2311 = vmatpush1.bf16.msra.mxu0 0
      %2312 = vmatprep.subr.bf16.mxu0 0
      %2313 = vmatpush1.bf16.msra.mxu0 0
      %2314 = vmatprep.subr.bf16.mxu0 0
      %2315 = vmatpush1.bf16.msra.mxu0 0
      %2316 = vmatprep.subr.bf16.mxu0 0
      %2317 = vmatpush1.bf16.msra.mxu0 0
      %2318 = vmatprep.subr.bf16.mxu0 0
      %2319 = vmatpush1.bf16.msra.mxu0 0
      %2320 = vmatprep.subr.bf16.mxu0 0
      %2321 = vmatpush1.bf16.msra.mxu0 0
      %2322 = vmatprep.subr.bf16.mxu0 0
      %2323 = vmatpush1.bf16.msra.mxu0 0
      %2324 = vmatprep.subr.bf16.mxu0 0
      %2325 = vmatpush1.bf16.msra.mxu0 0
      %2326 = vmatprep.subr.bf16.mxu0 0
      %2327 = vmatpush1.bf16.msra.mxu0 0
      %2328 = vmatprep.subr.bf16.mxu0 0
      %2329 = vmatpush1.bf16.msra.mxu0 0
      %2330 = vmatprep.subr.bf16.mxu0 0
      %2331 = vmatpush1.bf16.msra.mxu0 0
      %2332 = vmatprep.subr.bf16.mxu0 0
      %2333 = vmatpush1.bf16.msra.mxu0 0
      %2334 = vmatprep.subr.bf16.mxu0 0
      %2335 = vmatpush1.bf16.msra.mxu0 0
      %2336 = vmatprep.subr.bf16.mxu0 0
      %2337 = vmatpush1.bf16.msra.mxu0 0
      %2338 = vmatprep.mubr.bf16.mxu0 0
      %2339 = vmatmul.mubr.bf16.gmra.mrb[0].mxu0 %v1017
      %v2340 = vpop.f32.mrb[0].mxu0
      %v2341 = vadd.f32 0.0, %v2340
      %v2342 = vpop.f32.mrb[0].mxu0
      %v2343 = vpop.f32.mrb[0].mxu0
      %v2344 = vadd.f32 0.0, %v2343
      %v2345 = vpop.f32.mrb[0].mxu0
      %2346 = vmatprep.mubr.bf16.mxu0 0
      %2347 = vmatmul.mubr.bf16.gmra.mrb[0].mxu0 %v1020
      %v2348 = vpop.f32.mrb[0].mxu0
      %v2349 = vadd.f32 0.0, %v2348
      %v2350 = vpop.f32.mrb[0].mxu0
      %v2351 = vpop.f32.mrb[0].mxu0
      %v2352 = vadd.f32 0.0, %v2351
      %v2353 = vpop.f32.mrb[0].mxu0
      %2354 = vmatprep.mubr.bf16.mxu0 0
      %2355 = vmatmul.mubr.bf16.gmra.mrb[0].mxu0 %v1023
      %v2356 = vpop.f32.mrb[0].mxu0
      %v2357 = vadd.f32 0.0, %v2356
      %v2358 = vpop.f32.mrb[0].mxu0
      %v2359 = vpop.f32.mrb[0].mxu0
      %v2360 = vadd.f32 0.0, %v2359
      %v2361 = vpop.f32.mrb[0].mxu0
      %2362 = vmatprep.mubr.bf16.mxu0 0
      %2363 = vmatmul.mubr.bf16.gmra.mrb[0].mxu0 %v1026
      %v2364 = vpop.f32.mrb[0].mxu0
      %v2365 = vadd.f32 0.0, %v2364
      %v2366 = vpop.f32.mrb[0].mxu0
      %v2367 = vpop.f32.mrb[0].mxu0
      %v2368 = vadd.f32 0.0, %v2367
      %v2369 = vpop.f32.mrb[0].mxu0
      %2370 = vmatprep.mubr.bf16.mxu0 0
      %2371 = vmatmul.mubr.bf16.gmra.mrb[0].mxu0 %v1029
      %v2372 = vpop.f32.mrb[0].mxu0
      %v2373 = vadd.f32 0.0, %v2372
      %v2374 = vpop.f32.mrb[0].mxu0
      %v2375 = vpop.f32.mrb[0].mxu0
      %v2376 = vadd.f32 0.0, %v2375
      %v2377 = vpop.f32.mrb[0].mxu0
      %2378 = vmatprep.mubr.bf16.mxu0 0
      %2379 = vmatmul.mubr.bf16.gmra.mrb[0].mxu0 %v1032
      %v2380 = vpop.f32.mrb[0].mxu0
      %v2381 = vadd.f32 0.0, %v2380
      %v2382 = vpop.f32.mrb[0].mxu0
      %v2383 = vpop.f32.mrb[0].mxu0
      %v2384 = vadd.f32 0.0, %v2383
      %v2385 = vpop.f32.mrb[0].mxu0
      %2386 = vmatprep.mubr.bf16.mxu0 0
      %2387 = vmatmul.mubr.bf16.gmra.mrb[0].mxu0 %v1035
      %v2388 = vpop.f32.mrb[0].mxu0
      %v2389 = vadd.f32 0.0, %v2388
      %v2390 = vpop.f32.mrb[0].mxu0
      %v2391 = vpop.f32.mrb[0].mxu0
      %v2392 = vadd.f32 0.0, %v2391
      %v2393 = vpop.f32.mrb[0].mxu0
      %2394 = vmatprep.mubr.bf16.mxu0 0
      %2395 = vmatmul.mubr.bf16.gmra.mrb[0].mxu0 %v1038
      %v2396 = vpop.f32.mrb[0].mxu0
      %v2397 = vadd.f32 0.0, %v2396
      %v2398 = vpop.f32.mrb[0].mxu0
      %v2399 = vpop.f32.mrb[0].mxu0
      %v2400 = vadd.f32 0.0, %v2399
      %v2401 = vpop.f32.mrb[0].mxu0
      %2402 = vmatprep.mubr.bf16.mxu0 0
      %2403 = vmatmul.mubr.bf16.gmra.mrb[0].mxu0 %v1041
      %v2404 = vpop.f32.mrb[0].mxu0
      %v2405 = vadd.f32 0.0, %v2404
      %v2406 = vpop.f32.mrb[0].mxu0
      %v2407 = vpop.f32.mrb[0].mxu0
      %v2408 = vadd.f32 0.0, %v2407
      %v2409 = vpop.f32.mrb[0].mxu0
      %2410 = vmatprep.mubr.bf16.mxu0 0
      %2411 = vmatmul.mubr.bf16.gmra.mrb[0].mxu0 %v1044
      %v2412 = vpop.f32.mrb[0].mxu0
      %v2413 = vadd.f32 0.0, %v2412
      %v2414 = vpop.f32.mrb[0].mxu0
      %v2415 = vpop.f32.mrb[0].mxu0
      %v2416 = vadd.f32 0.0, %v2415
      %v2417 = vpop.f32.mrb[0].mxu0
      %2418 = vmatprep.mubr.bf16.mxu0 0
      %2419 = vmatmul.mubr.bf16.gmra.mrb[0].mxu0 %v1047
      %v2420 = vpop.f32.mrb[0].mxu0
      %v2421 = vadd.f32 0.0, %v2420
      %v2422 = vpop.f32.mrb[0].mxu0
      %v2423 = vpop.f32.mrb[0].mxu0
      %v2424 = vadd.f32 0.0, %v2423
      %v2425 = vpop.f32.mrb[0].mxu0
      %2426 = vmatprep.mubr.bf16.mxu0 0
      %2427 = vmatmul.mubr.bf16.gmra.mrb[0].mxu0 %v1050
      %v2428 = vpop.f32.mrb[0].mxu0
      %v2429 = vadd.f32 0.0, %v2428
      %v2430 = vpop.f32.mrb[0].mxu0
      %v2431 = vpop.f32.mrb[0].mxu0
      %v2432 = vadd.f32 0.0, %v2431
      %v2433 = vpop.f32.mrb[0].mxu0
      %2434 = vmatprep.mubr.bf16.mxu0 0
      %2435 = vmatmul.mubr.bf16.gmra.mrb[0].mxu0 %v1053
      %v2436 = vpop.f32.mrb[0].mxu0
      %v2437 = vadd.f32 0.0, %v2436
      %v2438 = vpop.f32.mrb[0].mxu0
      %v2439 = vpop.f32.mrb[0].mxu0
      %v2440 = vadd.f32 0.0, %v2439
      %v2441 = vpop.f32.mrb[0].mxu0
      %2442 = vmatprep.mubr.bf16.mxu0 0
      %2443 = vmatmul.mubr.bf16.gmra.mrb[0].mxu0 %v1056
      %v2444 = vpop.f32.mrb[0].mxu0
      %v2445 = vadd.f32 0.0, %v2444
      %v2446 = vpop.f32.mrb[0].mxu0
      %v2447 = vpop.f32.mrb[0].mxu0
      %v2448 = vadd.f32 0.0, %v2447
      %v2449 = vpop.f32.mrb[0].mxu0
      %2450 = vmatprep.mubr.bf16.mxu0 0
      %2451 = vmatmul.mubr.bf16.gmra.mrb[0].mxu0 %v1655
      %v2452 = vpop.f32.mrb[0].mxu0
      %v2453 = vadd.f32 0.0, %v2452
      %v2454 = vpop.f32.mrb[0].mxu0
      %v2455 = vpop.f32.mrb[0].mxu0
      %v2456 = vadd.f32 0.0, %v2455
      %v2457 = vpop.f32.mrb[0].mxu0
      %2458 = vmatprep.mubr.bf16.mxu0 0
      %2459 = vmatmul.mubr.bf16.gmra.mrb[0].mxu0 %v2301
      %v2460 = vpop.f32.mrb[0].mxu0
      %v2461 = vadd.f32 0.0, %v2460
      %v2462 = vpop.f32.mrb[0].mxu0
      %v2463 = vpop.f32.mrb[0].mxu0
      %v2464 = vadd.f32 0.0, %v2463
      %v2465 = vpop.f32.mrb[0].mxu0
      %2466 = vdwg.mxu0
      %v2467 = vadd.f32 %v2261, %v2341
      %v2468 = vadd.f32 %v2262, %v2344
      %v2469 = vadd.f32 %v2263, %v2349
      %v2470 = vadd.f32 %v2264, %v2352
      %v2471 = vadd.f32 %v2265, %v2357
      %v2472 = vadd.f32 %v2266, %v2360
      %v2473 = vadd.f32 %v2267, %v2365
      %v2474 = vadd.f32 %v2268, %v2368
      %v2475 = vadd.f32 %v2269, %v2373
      %v2476 = vadd.f32 %v2270, %v2376
      %v2477 = vadd.f32 %v2271, %v2381
      %v2478 = vadd.f32 %v2272, %v2384
      %v2479 = vadd.f32 %v2273, %v2389
      %v2480 = vadd.f32 %v2274, %v2392
      %v2481 = vadd.f32 %v2275, %v2397
      %v2482 = vadd.f32 %v2276, %v2400
      %v2483 = vadd.f32 %v2277, %v2405
      %v2484 = vadd.f32 %v2278, %v2408
      %v2485 = vadd.f32 %v2279, %v2413
      %v2486 = vadd.f32 %v2280, %v2416
      %v2487 = vadd.f32 %v2281, %v2421
      %v2488 = vadd.f32 %v2282, %v2424
      %v2489 = vadd.f32 %v2283, %v2429
      %v2490 = vadd.f32 %v2284, %v2432
      %v2491 = vadd.f32 %v2285, %v2437
      %v2492 = vadd.f32 %v2286, %v2440
      %v2493 = vadd.f32 %v2287, %v2445
      %v2494 = vadd.f32 %v2288, %v2448
      %v2495 = vadd.f32 %v2289, %v2453
      %v2496 = vadd.f32 %v2290, %v2456
      %v2497 = vadd.f32 %v2291, %v2461
      %v2498 = vadd.f32 %v2292, %v2464
      %v2500 = vshrl.u32 %v275, 16
      %v2502 = vrot.slane %v2500, 4
      %v2503 = vshll.u32 %v275, 16
      %v2505 = vrot.slane %v2503, 5
      %v2506 = vor.u32 %v2502, %v2505
      %v2507 = vrot.slane %v2506, 4
      %v2509 = vshll.u32 %v276, 16
      %v2511 = vrot.slane %v2509, 5
      %v2512 = vsel %vm281, %v2507, %v2511
      %v2513 = vshrl.u32 %v276, 16
      %v2515 = vrot.slane %v2513, 4
      %v2516 = vor.u32 %v2515, %v2511
      %v2517 = vrot.slane %v2516, 4
      %v2519 = vshll.u32 %v277, 16
      %v2521 = vrot.slane %v2519, 5
      %v2522 = vsel %vm281, %v2517, %v2521
      %s2523 = scalar_lea.vmem %s210, 14
      %v2524 = vld [vmem:[%s2523] sm:$0x3]
      %v2525 = vunpack.c.l.b16 %v2512
      %v2526 = vunpack.c.l.b16 %v2522
      %v2527 = vpack.c.b16 %v2526, %v2525
      %v2529 = vsel %vm716, %v2527, 0
      %v2532 = vsel %vm765, %v2524, 0
      %2534 = vmatprep.subr.bf16.mxu0 0
      %2535 = vmatpush1.bf16.msra.mxu0 %v2532
      %2536 = vmatprep.subr.bf16.mxu0 0
      %2537 = vmatpush1.bf16.msra.mxu0 0
      %2538 = vmatprep.subr.bf16.mxu0 0
      %2539 = vmatpush1.bf16.msra.mxu0 0
      %2540 = vmatprep.subr.bf16.mxu0 0
      %2541 = vmatpush1.bf16.msra.mxu0 0
      %2542 = vmatprep.subr.bf16.mxu0 0
      %2543 = vmatpush1.bf16.msra.mxu0 0
      %2544 = vmatprep.subr.bf16.mxu0 0
      %2545 = vmatpush1.bf16.msra.mxu0 0
      %2546 = vmatprep.subr.bf16.mxu0 0
      %2547 = vmatpush1.bf16.msra.mxu0 0
      %2548 = vmatprep.subr.bf16.mxu0 0
      %2549 = vmatpush1.bf16.msra.mxu0 0
      %2550 = vmatprep.subr.bf16.mxu0 0
      %2551 = vmatpush1.bf16.msra.mxu0 0
      %2552 = vmatprep.subr.bf16.mxu0 0
      %2553 = vmatpush1.bf16.msra.mxu0 0
      %2554 = vmatprep.subr.bf16.mxu0 0
      %2555 = vmatpush1.bf16.msra.mxu0 0
      %2556 = vmatprep.subr.bf16.mxu0 0
      %2557 = vmatpush1.bf16.msra.mxu0 0
      %2558 = vmatprep.subr.bf16.mxu0 0
      %2559 = vmatpush1.bf16.msra.mxu0 0
      %2560 = vmatprep.subr.bf16.mxu0 0
      %2561 = vmatpush1.bf16.msra.mxu0 0
      %2562 = vmatprep.subr.bf16.mxu0 0
      %2563 = vmatpush1.bf16.msra.mxu0 0
      %2564 = vmatprep.subr.bf16.mxu0 0
      %2565 = vmatpush1.bf16.msra.mxu0 0
      %2566 = vmatprep.mubr.bf16.mxu0 0
      %2567 = vmatmul.mubr.bf16.gmra.mrb[0].mxu0 %v724
      %v2568 = vpop.f32.mrb[0].mxu0
      %v2569 = vadd.f32 0.0, %v2568
      %v2570 = vpop.f32.mrb[0].mxu0
      %v2571 = vpop.f32.mrb[0].mxu0
      %v2572 = vadd.f32 0.0, %v2571
      %v2573 = vpop.f32.mrb[0].mxu0
      %2574 = vmatprep.mubr.bf16.mxu0 0
      %2575 = vmatmul.mubr.bf16.gmra.mrb[0].mxu0 %v727
      %v2576 = vpop.f32.mrb[0].mxu0
      %v2577 = vadd.f32 0.0, %v2576
      %v2578 = vpop.f32.mrb[0].mxu0
      %v2579 = vpop.f32.mrb[0].mxu0
      %v2580 = vadd.f32 0.0, %v2579
      %v2581 = vpop.f32.mrb[0].mxu0
      %2582 = vmatprep.mubr.bf16.mxu0 0
      %2583 = vmatmul.mubr.bf16.gmra.mrb[0].mxu0 %v730
      %v2584 = vpop.f32.mrb[0].mxu0
      %v2585 = vadd.f32 0.0, %v2584
      %v2586 = vpop.f32.mrb[0].mxu0
      %v2587 = vpop.f32.mrb[0].mxu0
      %v2588 = vadd.f32 0.0, %v2587
      %v2589 = vpop.f32.mrb[0].mxu0
      %2590 = vmatprep.mubr.bf16.mxu0 0
      %2591 = vmatmul.mubr.bf16.gmra.mrb[0].mxu0 %v733
      %v2592 = vpop.f32.mrb[0].mxu0
      %v2593 = vadd.f32 0.0, %v2592
      %v2594 = vpop.f32.mrb[0].mxu0
      %v2595 = vpop.f32.mrb[0].mxu0
      %v2596 = vadd.f32 0.0, %v2595
      %v2597 = vpop.f32.mrb[0].mxu0
      %2598 = vmatprep.mubr.bf16.mxu0 0
      %2599 = vmatmul.mubr.bf16.gmra.mrb[0].mxu0 %v736
      %v2600 = vpop.f32.mrb[0].mxu0
      %v2601 = vadd.f32 0.0, %v2600
      %v2602 = vpop.f32.mrb[0].mxu0
      %v2603 = vpop.f32.mrb[0].mxu0
      %v2604 = vadd.f32 0.0, %v2603
      %v2605 = vpop.f32.mrb[0].mxu0
      %2606 = vmatprep.mubr.bf16.mxu0 0
      %2607 = vmatmul.mubr.bf16.gmra.mrb[0].mxu0 %v739
      %v2608 = vpop.f32.mrb[0].mxu0
      %v2609 = vadd.f32 0.0, %v2608
      %v2610 = vpop.f32.mrb[0].mxu0
      %v2611 = vpop.f32.mrb[0].mxu0
      %v2612 = vadd.f32 0.0, %v2611
      %v2613 = vpop.f32.mrb[0].mxu0
      %2614 = vmatprep.mubr.bf16.mxu0 0
      %2615 = vmatmul.mubr.bf16.gmra.mrb[0].mxu0 %v742
      %v2616 = vpop.f32.mrb[0].mxu0
      %v2617 = vadd.f32 0.0, %v2616
      %v2618 = vpop.f32.mrb[0].mxu0
      %v2619 = vpop.f32.mrb[0].mxu0
      %v2620 = vadd.f32 0.0, %v2619
      %v2621 = vpop.f32.mrb[0].mxu0
      %2622 = vmatprep.mubr.bf16.mxu0 0
      %2623 = vmatmul.mubr.bf16.gmra.mrb[0].mxu0 %v745
      %v2624 = vpop.f32.mrb[0].mxu0
      %v2625 = vadd.f32 0.0, %v2624
      %v2626 = vpop.f32.mrb[0].mxu0
      %v2627 = vpop.f32.mrb[0].mxu0
      %v2628 = vadd.f32 0.0, %v2627
      %v2629 = vpop.f32.mrb[0].mxu0
      %2630 = vmatprep.mubr.bf16.mxu0 0
      %2631 = vmatmul.mubr.bf16.gmra.mrb[0].mxu0 %v748
      %v2632 = vpop.f32.mrb[0].mxu0
      %v2633 = vadd.f32 0.0, %v2632
      %v2634 = vpop.f32.mrb[0].mxu0
      %v2635 = vpop.f32.mrb[0].mxu0
      %v2636 = vadd.f32 0.0, %v2635
      %v2637 = vpop.f32.mrb[0].mxu0
      %2638 = vmatprep.mubr.bf16.mxu0 0
      %2639 = vmatmul.mubr.bf16.gmra.mrb[0].mxu0 %v751
      %v2640 = vpop.f32.mrb[0].mxu0
      %v2641 = vadd.f32 0.0, %v2640
      %v2642 = vpop.f32.mrb[0].mxu0
      %v2643 = vpop.f32.mrb[0].mxu0
      %v2644 = vadd.f32 0.0, %v2643
      %v2645 = vpop.f32.mrb[0].mxu0
      %2646 = vmatprep.mubr.bf16.mxu0 0
      %2647 = vmatmul.mubr.bf16.gmra.mrb[0].mxu0 %v754
      %v2648 = vpop.f32.mrb[0].mxu0
      %v2649 = vadd.f32 0.0, %v2648
      %v2650 = vpop.f32.mrb[0].mxu0
      %v2651 = vpop.f32.mrb[0].mxu0
      %v2652 = vadd.f32 0.0, %v2651
      %v2653 = vpop.f32.mrb[0].mxu0
      %2654 = vmatprep.mubr.bf16.mxu0 0
      %2655 = vmatmul.mubr.bf16.gmra.mrb[0].mxu0 %v757
      %v2656 = vpop.f32.mrb[0].mxu0
      %v2657 = vadd.f32 0.0, %v2656
      %v2658 = vpop.f32.mrb[0].mxu0
      %v2659 = vpop.f32.mrb[0].mxu0
      %v2660 = vadd.f32 0.0, %v2659
      %v2661 = vpop.f32.mrb[0].mxu0
      %2662 = vmatprep.mubr.bf16.mxu0 0
      %2663 = vmatmul.mubr.bf16.gmra.mrb[0].mxu0 %v760
      %v2664 = vpop.f32.mrb[0].mxu0
      %v2665 = vadd.f32 0.0, %v2664
      %v2666 = vpop.f32.mrb[0].mxu0
      %v2667 = vpop.f32.mrb[0].mxu0
      %v2668 = vadd.f32 0.0, %v2667
      %v2669 = vpop.f32.mrb[0].mxu0
      %2670 = vmatprep.mubr.bf16.mxu0 0
      %2671 = vmatmul.mubr.bf16.gmra.mrb[0].mxu0 %v763
      %v2672 = vpop.f32.mrb[0].mxu0
      %v2673 = vadd.f32 0.0, %v2672
      %v2674 = vpop.f32.mrb[0].mxu0
      %v2675 = vpop.f32.mrb[0].mxu0
      %v2676 = vadd.f32 0.0, %v2675
      %v2677 = vpop.f32.mrb[0].mxu0
      %2678 = vmatprep.mubr.bf16.mxu0 0
      %2679 = vmatmul.mubr.bf16.gmra.mrb[0].mxu0 %v1883
      %v2680 = vpop.f32.mrb[0].mxu0
      %v2681 = vadd.f32 0.0, %v2680
      %v2682 = vpop.f32.mrb[0].mxu0
      %v2683 = vpop.f32.mrb[0].mxu0
      %v2684 = vadd.f32 0.0, %v2683
      %v2685 = vpop.f32.mrb[0].mxu0
      %2686 = vmatprep.mubr.bf16.mxu0 0
      %2687 = vmatmul.mubr.bf16.gmra.mrb[0].mxu0 %v2529
      %v2688 = vpop.f32.mrb[0].mxu0
      %v2689 = vadd.f32 0.0, %v2688
      %v2690 = vpop.f32.mrb[0].mxu0
      %v2691 = vpop.f32.mrb[0].mxu0
      %v2692 = vadd.f32 0.0, %v2691
      %v2693 = vpop.f32.mrb[0].mxu0
      %2694 = vdwg.mxu0
      %v2695 = vadd.f32 %v2467, %v2569
      %v2696 = vadd.f32 %v2468, %v2572
      %v2697 = vadd.f32 %v2469, %v2577
      %v2698 = vadd.f32 %v2470, %v2580
      %v2699 = vadd.f32 %v2471, %v2585
      %v2700 = vadd.f32 %v2472, %v2588
      %v2701 = vadd.f32 %v2473, %v2593
      %v2702 = vadd.f32 %v2474, %v2596
      %v2703 = vadd.f32 %v2475, %v2601
      %v2704 = vadd.f32 %v2476, %v2604
      %v2705 = vadd.f32 %v2477, %v2609
      %v2706 = vadd.f32 %v2478, %v2612
      %v2707 = vadd.f32 %v2479, %v2617
      %v2708 = vadd.f32 %v2480, %v2620
      %v2709 = vadd.f32 %v2481, %v2625
      %v2710 = vadd.f32 %v2482, %v2628
      %v2711 = vadd.f32 %v2483, %v2633
      %v2712 = vadd.f32 %v2484, %v2636
      %v2713 = vadd.f32 %v2485, %v2641
      %v2714 = vadd.f32 %v2486, %v2644
      %v2715 = vadd.f32 %v2487, %v2649
      %v2716 = vadd.f32 %v2488, %v2652
      %v2717 = vadd.f32 %v2489, %v2657
      %v2718 = vadd.f32 %v2490, %v2660
      %v2719 = vadd.f32 %v2491, %v2665
      %v2720 = vadd.f32 %v2492, %v2668
      %v2721 = vadd.f32 %v2493, %v2673
      %v2722 = vadd.f32 %v2494, %v2676
      %v2723 = vadd.f32 %v2495, %v2681
      %v2724 = vadd.f32 %v2496, %v2684
      %v2725 = vadd.f32 %v2497, %v2689
      %v2726 = vadd.f32 %v2498, %v2692
      %v2728 = vrot.slane %v275, 5
      %v2729 = vrot.slane %v2728, 4
      %v2730 = vrot.slane %v276, 5
      %v2731 = vsel %vm1240, %v2729, %v2730
      %v2732 = vrot.slane %v2730, 4
      %v2733 = vrot.slane %v277, 5
      %v2734 = vsel %vm1240, %v2732, %v2733
      %s2735 = scalar_lea.vmem %s210, 16
      %v2736 = vld [vmem:[%s2735] sm:$0x3]
      %v2737 = vunpack.c.l.b16 %v2731
      %v2738 = vunpack.c.l.b16 %v2734
      %v2739 = vpack.c.b16 %v2738, %v2737
      %v2741 = vsel %vm716, %v2739, 0
      %v2744 = vsel %vm765, %v2736, 0
      %2746 = vmatprep.subr.bf16.mxu0 0
      %2747 = vmatpush1.bf16.msra.mxu0 %v2744
      %2748 = vmatprep.subr.bf16.mxu0 0
      %2749 = vmatpush1.bf16.msra.mxu0 0
      %2750 = vmatprep.subr.bf16.mxu0 0
      %2751 = vmatpush1.bf16.msra.mxu0 0
      %2752 = vmatprep.subr.bf16.mxu0 0
      %2753 = vmatpush1.bf16.msra.mxu0 0
      %2754 = vmatprep.subr.bf16.mxu0 0
      %2755 = vmatpush1.bf16.msra.mxu0 0
      %2756 = vmatprep.subr.bf16.mxu0 0
      %2757 = vmatpush1.bf16.msra.mxu0 0
      %2758 = vmatprep.subr.bf16.mxu0 0
      %2759 = vmatpush1.bf16.msra.mxu0 0
      %2760 = vmatprep.subr.bf16.mxu0 0
      %2761 = vmatpush1.bf16.msra.mxu0 0
      %2762 = vmatprep.subr.bf16.mxu0 0
      %2763 = vmatpush1.bf16.msra.mxu0 0
      %2764 = vmatprep.subr.bf16.mxu0 0
      %2765 = vmatpush1.bf16.msra.mxu0 0
      %2766 = vmatprep.subr.bf16.mxu0 0
      %2767 = vmatpush1.bf16.msra.mxu0 0
      %2768 = vmatprep.subr.bf16.mxu0 0
      %2769 = vmatpush1.bf16.msra.mxu0 0
      %2770 = vmatprep.subr.bf16.mxu0 0
      %2771 = vmatpush1.bf16.msra.mxu0 0
      %2772 = vmatprep.subr.bf16.mxu0 0
      %2773 = vmatpush1.bf16.msra.mxu0 0
      %2774 = vmatprep.subr.bf16.mxu0 0
      %2775 = vmatpush1.bf16.msra.mxu0 0
      %2776 = vmatprep.subr.bf16.mxu0 0
      %2777 = vmatpush1.bf16.msra.mxu0 0
      %2778 = vmatprep.mubr.bf16.mxu0 0
      %2779 = vmatmul.mubr.bf16.gmra.mrb[0].mxu0 %v1410
      %v2780 = vpop.f32.mrb[0].mxu0
      %v2781 = vadd.f32 0.0, %v2780
      %v2782 = vpop.f32.mrb[0].mxu0
      %v2783 = vpop.f32.mrb[0].mxu0
      %v2784 = vadd.f32 0.0, %v2783
      %v2785 = vpop.f32.mrb[0].mxu0
      %2786 = vmatprep.mubr.bf16.mxu0 0
      %2787 = vmatmul.mubr.bf16.gmra.mrb[0].mxu0 %v1413
      %v2788 = vpop.f32.mrb[0].mxu0
      %v2789 = vadd.f32 0.0, %v2788
      %v2790 = vpop.f32.mrb[0].mxu0
      %v2791 = vpop.f32.mrb[0].mxu0
      %v2792 = vadd.f32 0.0, %v2791
      %v2793 = vpop.f32.mrb[0].mxu0
      %2794 = vmatprep.mubr.bf16.mxu0 0
      %2795 = vmatmul.mubr.bf16.gmra.mrb[0].mxu0 %v1416
      %v2796 = vpop.f32.mrb[0].mxu0
      %v2797 = vadd.f32 0.0, %v2796
      %v2798 = vpop.f32.mrb[0].mxu0
      %v2799 = vpop.f32.mrb[0].mxu0
      %v2800 = vadd.f32 0.0, %v2799
      %v2801 = vpop.f32.mrb[0].mxu0
      %2802 = vmatprep.mubr.bf16.mxu0 0
      %2803 = vmatmul.mubr.bf16.gmra.mrb[0].mxu0 %v1419
      %v2804 = vpop.f32.mrb[0].mxu0
      %v2805 = vadd.f32 0.0, %v2804
      %v2806 = vpop.f32.mrb[0].mxu0
      %v2807 = vpop.f32.mrb[0].mxu0
      %v2808 = vadd.f32 0.0, %v2807
      %v2809 = vpop.f32.mrb[0].mxu0
      %2810 = vmatprep.mubr.bf16.mxu0 0
      %2811 = vmatmul.mubr.bf16.gmra.mrb[0].mxu0 %v1422
      %v2812 = vpop.f32.mrb[0].mxu0
      %v2813 = vadd.f32 0.0, %v2812
      %v2814 = vpop.f32.mrb[0].mxu0
      %v2815 = vpop.f32.mrb[0].mxu0
      %v2816 = vadd.f32 0.0, %v2815
      %v2817 = vpop.f32.mrb[0].mxu0
      %2818 = vmatprep.mubr.bf16.mxu0 0
      %2819 = vmatmul.mubr.bf16.gmra.mrb[0].mxu0 %v1425
      %v2820 = vpop.f32.mrb[0].mxu0
      %v2821 = vadd.f32 0.0, %v2820
      %v2822 = vpop.f32.mrb[0].mxu0
      %v2823 = vpop.f32.mrb[0].mxu0
      %v2824 = vadd.f32 0.0, %v2823
      %v2825 = vpop.f32.mrb[0].mxu0
      %2826 = vmatprep.mubr.bf16.mxu0 0
      %2827 = vmatmul.mubr.bf16.gmra.mrb[0].mxu0 %v1428
      %v2828 = vpop.f32.mrb[0].mxu0
      %v2829 = vadd.f32 0.0, %v2828
      %v2830 = vpop.f32.mrb[0].mxu0
      %v2831 = vpop.f32.mrb[0].mxu0
      %v2832 = vadd.f32 0.0, %v2831
      %v2833 = vpop.f32.mrb[0].mxu0
      %2834 = vmatprep.mubr.bf16.mxu0 0
      %2835 = vmatmul.mubr.bf16.gmra.mrb[0].mxu0 %v1431
      %v2836 = vpop.f32.mrb[0].mxu0
      %v2837 = vadd.f32 0.0, %v2836
      %v2838 = vpop.f32.mrb[0].mxu0
      %v2839 = vpop.f32.mrb[0].mxu0
      %v2840 = vadd.f32 0.0, %v2839
      %v2841 = vpop.f32.mrb[0].mxu0
      %2842 = vmatprep.mubr.bf16.mxu0 0
      %2843 = vmatmul.mubr.bf16.gmra.mrb[0].mxu0 %v1434
      %v2844 = vpop.f32.mrb[0].mxu0
      %v2845 = vadd.f32 0.0, %v2844
      %v2846 = vpop.f32.mrb[0].mxu0
      %v2847 = vpop.f32.mrb[0].mxu0
      %v2848 = vadd.f32 0.0, %v2847
      %v2849 = vpop.f32.mrb[0].mxu0
      %2850 = vmatprep.mubr.bf16.mxu0 0
      %2851 = vmatmul.mubr.bf16.gmra.mrb[0].mxu0 %v1437
      %v2852 = vpop.f32.mrb[0].mxu0
      %v2853 = vadd.f32 0.0, %v2852
      %v2854 = vpop.f32.mrb[0].mxu0
      %v2855 = vpop.f32.mrb[0].mxu0
      %v2856 = vadd.f32 0.0, %v2855
      %v2857 = vpop.f32.mrb[0].mxu0
      %2858 = vmatprep.mubr.bf16.mxu0 0
      %2859 = vmatmul.mubr.bf16.gmra.mrb[0].mxu0 %v1440
      %v2860 = vpop.f32.mrb[0].mxu0
      %v2861 = vadd.f32 0.0, %v2860
      %v2862 = vpop.f32.mrb[0].mxu0
      %v2863 = vpop.f32.mrb[0].mxu0
      %v2864 = vadd.f32 0.0, %v2863
      %v2865 = vpop.f32.mrb[0].mxu0
      %2866 = vmatprep.mubr.bf16.mxu0 0
      %2867 = vmatmul.mubr.bf16.gmra.mrb[0].mxu0 %v1443
      %v2868 = vpop.f32.mrb[0].mxu0
      %v2869 = vadd.f32 0.0, %v2868
      %v2870 = vpop.f32.mrb[0].mxu0
      %v2871 = vpop.f32.mrb[0].mxu0
      %v2872 = vadd.f32 0.0, %v2871
      %v2873 = vpop.f32.mrb[0].mxu0
      %2874 = vmatprep.mubr.bf16.mxu0 0
      %2875 = vmatmul.mubr.bf16.gmra.mrb[0].mxu0 %v1446
      %v2876 = vpop.f32.mrb[0].mxu0
      %v2877 = vadd.f32 0.0, %v2876
      %v2878 = vpop.f32.mrb[0].mxu0
      %v2879 = vpop.f32.mrb[0].mxu0
      %v2880 = vadd.f32 0.0, %v2879
      %v2881 = vpop.f32.mrb[0].mxu0
      %2882 = vmatprep.mubr.bf16.mxu0 0
      %2883 = vmatmul.mubr.bf16.gmra.mrb[0].mxu0 %v1449
      %v2884 = vpop.f32.mrb[0].mxu0
      %v2885 = vadd.f32 0.0, %v2884
      %v2886 = vpop.f32.mrb[0].mxu0
      %v2887 = vpop.f32.mrb[0].mxu0
      %v2888 = vadd.f32 0.0, %v2887
      %v2889 = vpop.f32.mrb[0].mxu0
      %2890 = vmatprep.mubr.bf16.mxu0 0
      %2891 = vmatmul.mubr.bf16.gmra.mrb[0].mxu0 %v2095
      %v2892 = vpop.f32.mrb[0].mxu0
      %v2893 = vadd.f32 0.0, %v2892
      %v2894 = vpop.f32.mrb[0].mxu0
      %v2895 = vpop.f32.mrb[0].mxu0
      %v2896 = vadd.f32 0.0, %v2895
      %v2897 = vpop.f32.mrb[0].mxu0
      %2898 = vmatprep.mubr.bf16.mxu0 0
      %2899 = vmatmul.mubr.bf16.gmra.mrb[0].mxu0 %v2741
      %v2900 = vpop.f32.mrb[0].mxu0
      %v2901 = vadd.f32 0.0, %v2900
      %v2902 = vpop.f32.mrb[0].mxu0
      %v2903 = vpop.f32.mrb[0].mxu0
      %v2904 = vadd.f32 0.0, %v2903
      %v2905 = vpop.f32.mrb[0].mxu0
      %2906 = vdwg.mxu0
      %v2907 = vadd.f32 %v2695, %v2781
      %v2908 = vadd.f32 %v2696, %v2784
      %v2909 = vadd.f32 %v2697, %v2789
      %v2910 = vadd.f32 %v2698, %v2792
      %v2911 = vadd.f32 %v2699, %v2797
      %v2912 = vadd.f32 %v2700, %v2800
      %v2913 = vadd.f32 %v2701, %v2805
      %v2914 = vadd.f32 %v2702, %v2808
      %v2915 = vadd.f32 %v2703, %v2813
      %v2916 = vadd.f32 %v2704, %v2816
      %v2917 = vadd.f32 %v2705, %v2821
      %v2918 = vadd.f32 %v2706, %v2824
      %v2919 = vadd.f32 %v2707, %v2829
      %v2920 = vadd.f32 %v2708, %v2832
      %v2921 = vadd.f32 %v2709, %v2837
      %v2922 = vadd.f32 %v2710, %v2840
      %v2923 = vadd.f32 %v2711, %v2845
      %v2924 = vadd.f32 %v2712, %v2848
      %v2925 = vadd.f32 %v2713, %v2853
      %v2926 = vadd.f32 %v2714, %v2856
      %v2927 = vadd.f32 %v2715, %v2861
      %v2928 = vadd.f32 %v2716, %v2864
      %v2929 = vadd.f32 %v2717, %v2869
      %v2930 = vadd.f32 %v2718, %v2872
      %v2931 = vadd.f32 %v2719, %v2877
      %v2932 = vadd.f32 %v2720, %v2880
      %v2933 = vadd.f32 %v2721, %v2885
      %v2934 = vadd.f32 %v2722, %v2888
      %v2935 = vadd.f32 %v2723, %v2893
      %v2936 = vadd.f32 %v2724, %v2896
      %v2937 = vadd.f32 %v2725, %v2901
      %v2938 = vadd.f32 %v2726, %v2904
      %v2939 = vld [vmem:[%s213] sm:$0x1]
      %v2941 = vlaneseq
      %v2942 = vshrl.u32 %v2941, 7
      %v2943 = vsub.s32 0, %v2942
      %v2944 = vrot.slane %v2939, %v2943
      %v2946 = vadd.f32 %v2907, %v2944
      %v2947 = vadd.f32 %v2908, %v2944
      %v2948 = vadd.f32 %v2909, %v2944
      %v2949 = vadd.f32 %v2910, %v2944
      %v2950 = vadd.f32 %v2911, %v2944
      %v2951 = vadd.f32 %v2912, %v2944
      %v2952 = vadd.f32 %v2913, %v2944
      %v2953 = vadd.f32 %v2914, %v2944
      %v2954 = vadd.f32 %v2915, %v2944
      %v2955 = vadd.f32 %v2916, %v2944
      %v2956 = vadd.f32 %v2917, %v2944
      %v2957 = vadd.f32 %v2918, %v2944
      %v2958 = vadd.f32 %v2919, %v2944
      %v2959 = vadd.f32 %v2920, %v2944
      %v2960 = vadd.f32 %v2921, %v2944
      %v2961 = vadd.f32 %v2922, %v2944
      %v2962 = vadd.f32 %v2923, %v2944
      %v2963 = vadd.f32 %v2924, %v2944
      %v2964 = vadd.f32 %v2925, %v2944
      %v2965 = vadd.f32 %v2926, %v2944
      %v2966 = vadd.f32 %v2927, %v2944
      %v2967 = vadd.f32 %v2928, %v2944
      %v2968 = vadd.f32 %v2929, %v2944
      %v2969 = vadd.f32 %v2930, %v2944
      %v2970 = vadd.f32 %v2931, %v2944
      %v2971 = vadd.f32 %v2932, %v2944
      %v2972 = vadd.f32 %v2933, %v2944
      %v2973 = vadd.f32 %v2934, %v2944
      %v2974 = vadd.f32 %v2935, %v2944
      %v2975 = vadd.f32 %v2936, %v2944
      %v2976 = vadd.f32 %v2937, %v2944
      %v2977 = vadd.f32 %v2938, %v2944
      %v2978 = vmax.f32 %v2946, 0.0
      %v2979 = vmax.f32 %v2947, 0.0
      %v2980 = vmax.f32 %v2948, 0.0
      %v2981 = vmax.f32 %v2949, 0.0
      %v2982 = vmax.f32 %v2950, 0.0
      %v2983 = vmax.f32 %v2951, 0.0
      %v2984 = vmax.f32 %v2952, 0.0
      %v2985 = vmax.f32 %v2953, 0.0
      %v2986 = vmax.f32 %v2954, 0.0
      %v2987 = vmax.f32 %v2955, 0.0
      %v2988 = vmax.f32 %v2956, 0.0
      %v2989 = vmax.f32 %v2957, 0.0
      %v2990 = vmax.f32 %v2958, 0.0
      %v2991 = vmax.f32 %v2959, 0.0
      %v2992 = vmax.f32 %v2960, 0.0
      %v2993 = vmax.f32 %v2961, 0.0
      %v2994 = vmax.f32 %v2962, 0.0
      %v2995 = vmax.f32 %v2963, 0.0
      %v2996 = vmax.f32 %v2964, 0.0
      %v2997 = vmax.f32 %v2965, 0.0
      %v2998 = vmax.f32 %v2966, 0.0
      %v2999 = vmax.f32 %v2967, 0.0
      %v3000 = vmax.f32 %v2968, 0.0
      %v3001 = vmax.f32 %v2969, 0.0
      %v3002 = vmax.f32 %v2970, 0.0
      %v3003 = vmax.f32 %v2971, 0.0
      %v3004 = vmax.f32 %v2972, 0.0
      %v3005 = vmax.f32 %v2973, 0.0
      %v3006 = vmax.f32 %v2974, 0.0
      %v3007 = vmax.f32 %v2975, 0.0
      %v3008 = vmax.f32 %v2976, 0.0
      %v3009 = vmax.f32 %v2977, 0.0
      %3010 = vst [vmem:[%s221] sm:$0xff] %v2978
      %3011 = vst [vmem:[%s221 + $0x8] sm:$0xff] %v2979
      %3012 = vst [vmem:[%s221 + $0x10] sm:$0xff] %v2980
      %3013 = vst [vmem:[%s221 + $0x18] sm:$0xff] %v2981
      %3014 = vst [vmem:[%s221 + $0x20] sm:$0xff] %v2982
      %3015 = vst [vmem:[%s221 + $0x28] sm:$0xff] %v2983
      %3016 = vst [vmem:[%s221 + $0x30] sm:$0xff] %v2984
      %3017 = vst [vmem:[%s221 + $0x38] sm:$0xff] %v2985
      %3018 = vst [vmem:[%s221 + $0x40] sm:$0xff] %v2986
      %3019 = vst [vmem:[%s221 + $0x48] sm:$0xff] %v2987
      %3020 = vst [vmem:[%s221 + $0x50] sm:$0xff] %v2988
      %3021 = vst [vmem:[%s221 + $0x58] sm:$0xff] %v2989
      %3022 = vst [vmem:[%s221 + $0x60] sm:$0xff] %v2990
      %3023 = vst [vmem:[%s221 + $0x68] sm:$0xff] %v2991
      %3024 = vst [vmem:[%s221 + $0x70] sm:$0xff] %v2992
      %3025 = vst [vmem:[%s221 + $0x78] sm:$0xff] %v2993
      %3026 = vst [vmem:[%s221 + $0x80] sm:$0xff] %v2994
      %3027 = vst [vmem:[%s221 + $0x88] sm:$0xff] %v2995
      %3028 = vst [vmem:[%s221 + $0x90] sm:$0xff] %v2996
      %3029 = vst [vmem:[%s221 + $0x98] sm:$0xff] %v2997
      %3030 = vst [vmem:[%s221 + $0xa0] sm:$0xff] %v2998
      %3031 = vst [vmem:[%s221 + $0xa8] sm:$0xff] %v2999
      %3032 = vst [vmem:[%s221 + $0xb0] sm:$0xff] %v3000
      %3033 = vst [vmem:[%s221 + $0xb8] sm:$0xff] %v3001
      %3034 = vst [vmem:[%s221 + $0xc0] sm:$0xff] %v3002
      %3035 = vst [vmem:[%s221 + $0xc8] sm:$0xff] %v3003
      %3036 = vst [vmem:[%s221 + $0xd0] sm:$0xff] %v3004
      %3037 = vst [vmem:[%s221 + $0xd8] sm:$0xff] %v3005
      %3038 = vst [vmem:[%s221 + $0xe0] sm:$0xff] %v3006
      %3039 = vst [vmem:[%s221 + $0xe8] sm:$0xff] %v3007
      %3040 = vst [vmem:[%s221 + $0xf0] sm:$0xff] %v3008
      %3041 = vst [vmem:[%s221 + $0xf8] sm:$0xff] %v3009
      %s3042 = smul.u32 32, %s18
      %p3043 = scmp.lt.s32.totalorder %s3042, 63
      %s3044 = scalar_select %p3043, %s3042, 63
      %p3045 = scmp.lt.s32.totalorder %s19, 0
      %s3046 = scalar_select %p3045, %s19, 0
      %s3047 = sadd.s32 %s3046, %s3044
      %s3048 = smul.addr %s3047, 8
      %s3049 = scalar_lea.vmem %s3, %s3048
      // Predicated region
      $region33: #{basic_conv_forward.1} parent=31 // pred_check
        %p3050 = pneg %p124
      $region34: #{basic_conv_forward.1} parent=31 // pred_check_branch
        %3052 = sbr.rel (%p3050) target = $region36
      $region35: #{basic_conv_forward.1} parent=31 // pred_region
        %s3053 = smul.u32 32, %s18
      $region36: #{basic_conv_forward.1} parent=31 // pred_fallthru
        _
    $region32: #{basic_conv_forward.1} parent=5 // pred_fallthru
      _
    %p3054 = scmp.le.s32.totalorder 2, %s9
    // Predicated region
    $region37: #{basic_conv_forward.1} parent=5 // pred_check
      %p3055 = pneg %p3054
    $region38: #{basic_conv_forward.1} parent=5 // pred_check_branch
      %3057 = sbr.rel (%p3055) target = $region40
    $region39: #{basic_conv_forward.1} parent=5 // pred_region
      %s3058 = ssub.s32 %s9, 2
      // Predicated region
      $region41: #{basic_conv_forward.1} parent=39 // pred_check
        %p3059 = pneg %p130
      $region42: #{basic_conv_forward.1} parent=39 // pred_check_branch
        %3061 = sbr.rel (%p3059) target = $region44
      $region43: #{basic_conv_forward.1} parent=39 // pred_region
        %s3062 = smul.u32 32, %s20
        %p3063 = scmp.lt.s32.totalorder %s3062, 63
        %s3064 = scalar_select %p3063, %s3062, 63
        %p3065 = scmp.lt.s32.totalorder %s21, 0
        %s3066 = scalar_select %p3065, %s21, 0
        %s3067 = sadd.s32 %s3066, %s3064
        %s3068 = smul.addr %s3067, 8
        %s3069 = scalar_lea.vmem %s3, %s3068
      $region44: #{basic_conv_forward.1} parent=39 // pred_fallthru
        _
    $region40: #{basic_conv_forward.1} parent=5 // pred_fallthru
      _
  $region6: #{basic_conv_forward.1} parent=0 // loop_footer
    %s13 = sadd.s32 1, %s9
  $region7: #{basic_conv_forward.1} parent=0 // loop_footer_branch
    %8 = sbr.rel target = $region3
  $region8: #{basic_conv_forward.1} parent=0 // loop_exit
    _

</llo_original>
